<compile_context>
chip_gen: v7x
topology: tpu7x:2x2x1
jax: 0.10.0
libtpu: 0.0.40
codegen_flags: <defaults>
</compile_context>

<pallas_src>
import functools

import jax
import jax.numpy as jnp
import numpy as np
from jax.experimental import pallas as pl
from jax.experimental.pallas import tpu as pltpu

EPS = 1e-5


def _conv_fused_kernel(x_ref, w1_ref, b1_ref, w2_ref, b2_ref, o_ref,
                       xpad_ref, act_ref, *, S, H, W2_OUT):
    """Fused Conv2d(1,2,(2,H),p=1)+BN+ReLU -> Conv2d(2,1,(3,H),p=1)+BN+ReLU.

    One batch element per grid step; sequence axis on lanes.
      x_ref    : (1, H, S)        transposed input block (VMEM)
      w1_ref   : (2*2*H,)  f32    BN-folded conv1 weights (SMEM scalars)
      b1_ref   : (2,)      f32    BN-folded conv1 bias    (SMEM)
      w2_ref   : (2*3*H,)  f32    BN-folded conv2 weights (SMEM)
      b2_ref   : (1,)      f32    BN-folded conv2 bias    (SMEM)
      o_ref    : (1, W2_OUT, S+1) output block (seq on lanes)
      xpad_ref : (H, S+2)         seq-zero-padded input scratch (VMEM)
      act_ref  : (2*5, S+3)       fully zero-padded layer-1 activation (VMEM)
    """
    Sp1 = S + 1

    # ---- in-kernel zero padding of the input along the seq (lane) axis ----
    xpad_ref[...] = jnp.zeros((H, S + 2), jnp.float32)
    xpad_ref[:, 1:S + 1] = x_ref[0]

    # Padded layer-1 activation lives entirely in VMEM (no HBM round trip).
    # Row index = ci*5 + padded_width; lanes = padded height (S+3).
    act_ref[...] = jnp.zeros((2 * 5, S + 3), jnp.float32)

    # ---- layer 1: Conv2d(1, 2, (2, H), padding=1) + folded BN + ReLU ----
    # out1[c, t, wo] = relu(b1f[c] + sum_{kh,kw} xpad[t+kh, wo+kw] * w1f[c,kh,kw])
    for c in range(2):                      # output channels
        for wo in range(3):                 # output width positions
            acc = jnp.full((1, Sp1), b1_ref[c], jnp.float32)
            for kh in range(2):             # kernel height taps
                for kw in range(H):         # kernel width taps (unrolled FMAs)
                    j = wo + kw             # padded-width index, 0..H+1
                    if j == 0 or j == H + 1:
                        continue            # zero-pad column: no contribution
                    w = w1_ref[c * 2 * H + kh * H + kw]      # SMEM scalar
                    acc = acc + xpad_ref[j - 1:j, kh:kh + Sp1] * w
            # lane-dense row write into the padded layer-2 input scratch
            r = c * 5 + wo + 1
            act_ref[r:r + 1, 1:Sp1 + 1] = jnp.maximum(acc, 0.0)

    # ---- layer 2: Conv2d(2, 1, (3, H), padding=1) + folded BN + ReLU ----
    for wo in range(W2_OUT):                # output width positions
        acc = jnp.full((1, Sp1), b2_ref[0], jnp.float32)
        for ci in range(2):                 # input channels
            for kh in range(3):             # kernel height taps
                for kw in range(H):         # kernel width taps
                    r = ci * 5 + wo + kw    # padded-width index 0..4
                    w = w2_ref[ci * 3 * H + kh * H + kw]     # SMEM scalar
                    acc = acc + act_ref[r:r + 1, kh:kh + Sp1] * w
        o_ref[0, wo:wo + 1, :] = jnp.maximum(acc, 0.0)


def _fold_bn(gamma, beta, mean, var):
    scale = gamma / jnp.sqrt(var + EPS)
    shift = beta - mean * scale
    return scale, shift


def conv_forward(x, w1, b1, bn1, w2, b2, bn2):
    """Forward pass of the `Conv` module. x: (B, S, H) float32."""
    B, S, H = x.shape
    assert 1 <= H <= 5, \
        "layer2 kernel width (= hidden_size) exceeds its padded input width of 5"
    W2_OUT = 6 - H

    # Fold inference-mode BN into the conv weights / bias (host-side constants).
    scale1, shift1 = _fold_bn(*bn1)
    scale2, shift2 = _fold_bn(*bn2)
    w1f = (w1[:, 0] * scale1[:, None, None]).reshape(-1)     # (2*2*H,)
    b1f = b1 * scale1 + shift1                               # (2,)
    w2f = (w2[0] * scale2[0]).reshape(-1)                    # (2*3*H,)
    b2f = b2 * scale2 + shift2                               # (1,)

    # Re-layout: sequence axis -> lanes.
    xT = jnp.transpose(x, (0, 2, 1))                         # (B, H, S)

    smem = pl.BlockSpec(memory_space=pltpu.MemorySpace.SMEM)
    out = pl.pallas_call(
        functools.partial(_conv_fused_kernel, S=S, H=H, W2_OUT=W2_OUT),
        out_shape=jax.ShapeDtypeStruct((B, W2_OUT, S + 1), jnp.float32),
        grid=(B,),
        in_specs=[
            pl.BlockSpec((1, H, S), lambda b: (b, 0, 0)),
            smem, smem, smem, smem,
        ],
        out_specs=pl.BlockSpec((1, W2_OUT, S + 1), lambda b: (b, 0, 0)),
        scratch_shapes=[
            pltpu.VMEM((H, S + 2), jnp.float32),        # seq-padded input
            pltpu.VMEM((2 * 5, S + 3), jnp.float32),    # padded layer-1 act
        ],
        compiler_params=pltpu.CompilerParams(dimension_semantics=("parallel",)),
    )(xT, w1f, b1f, w2f, b2f)

    # Back to PyTorch NCHW: (B, 1, S+1, W2_OUT)
    return jnp.transpose(out, (0, 2, 1))[:, None]


def _reference(x, w1, b1, bn1, w2, b2, bn2):
    """Pure-JAX reference (NCHW convs, inference-mode BN, ReLU)."""
    def bn(y, params):
        g, be, m, v = (p[None, :, None, None] for p in params)
        return g * (y - m) / jnp.sqrt(v + EPS) + be

    dn = ("NCHW", "OIHW", "NCHW")
    xu = x[:, None, :, :]
    y = jax.lax.conv_general_dilated(xu, w1, (1, 1), ((1, 1), (1, 1)),
                                     dimension_numbers=dn)
    y = jnp.maximum(bn(y + b1[None, :, None, None], bn1), 0.0)
    z = jax.lax.conv_general_dilated(y, w2, (1, 1), ((1, 1), (1, 1)),
                                     dimension_numbers=dn)
    z = jnp.maximum(bn(z + b2[None, :, None, None], bn2), 0.0)
    return z


if __name__ == "__main__":
    B, S, H = 2, 8, 4          # hidden_size <= 5 required by layer2's conv geometry
    key = jax.random.PRNGKey(0)
    kx, kw1, kb1, kw2, kb2 = jax.random.split(key, 5)

    x = jax.random.normal(kx, (B, S, H), jnp.float32)
    w1 = jax.random.normal(kw1, (2, 1, 2, H), jnp.float32) * 0.2   # Conv2d(1, 2, (2, H))
    b1 = jax.random.normal(kb1, (2,), jnp.float32) * 0.1
    w2 = jax.random.normal(kw2, (1, 2, 3, H), jnp.float32) * 0.2   # Conv2d(2, 1, (3, H))
    b2 = jax.random.normal(kb2, (1,), jnp.float32) * 0.1

    # PyTorch-default BN parameters (gamma=1, beta=0, running_mean=0, running_var=1).
    # TODO(synk): BatchNorm1d(2) on a 4D tensor raises in PyTorch; applied as
    #   inference-mode per-channel BN over conv1's 2 output channels instead.
    bn1 = (jnp.ones((2,), jnp.float32), jnp.zeros((2,), jnp.float32),
           jnp.zeros((2,), jnp.float32), jnp.ones((2,), jnp.float32))
    # TODO(synk): BatchNorm2d(32) mismatches conv2's single output channel and
    #   raises in PyTorch; applied as inference-mode BN over that 1 channel.
    bn2 = (jnp.ones((1,), jnp.float32), jnp.zeros((1,), jnp.float32),
           jnp.zeros((1,), jnp.float32), jnp.ones((1,), jnp.float32))

    out = conv_forward(x, w1, b1, bn1, w2, b2, bn2)
    out = jax.block_until_ready(out)

    ref = _reference(x, w1, b1, bn1, w2, b2, bn2)
    assert out.shape == (B, 1, S + 1, 6 - H), out.shape
    np.testing.assert_allclose(np.asarray(out), np.asarray(ref),
                               atol=1e-4, rtol=1e-4)
    print("KERNEL_OK")
</pallas_src>

<mosaic_0001>
module attributes {stable_mosaic.version = 11 : i64} {
  func.func @_conv_fused_kernel(%arg0: i32, %arg1: memref<1x4x8xf32, #tpu.memory_space<vmem>>, %arg2: memref<16xf32, #tpu.memory_space<smem>>, %arg3: memref<2xf32, #tpu.memory_space<smem>>, %arg4: memref<24xf32, #tpu.memory_space<smem>>, %arg5: memref<1xf32, #tpu.memory_space<smem>>, %arg6: memref<1x2x9xf32, #tpu.memory_space<vmem>>, %arg7: memref<4x10xf32, #tpu.memory_space<vmem>>, %arg8: memref<10x11xf32, #tpu.memory_space<vmem>>) attributes {dimension_semantics = [#tpu.dimension_semantics<parallel>], iteration_bounds = array<i64: 2>, scalar_prefetch = 0 : i64, scratch_operands = 2 : i64, tpu.core_type = #tpu.core_type<tc>, window_params = [{transform_indices = @transform_0, window_bounds = array<i64: 1, 4, 8>}, {transform_indices = @transform_1, window_bounds = array<i64: 16>}, {transform_indices = @transform_2, window_bounds = array<i64: 2>}, {transform_indices = @transform_3, window_bounds = array<i64: 24>}, {transform_indices = @transform_4, window_bounds = array<i64: 1>}, {transform_indices = @transform_5, window_bounds = array<i64: 1, 2, 9>}]} {
    %cst = arith.constant 0.000000e+00 : f32
    %0 = vector.broadcast %cst : f32 to vector<4x10xf32>
    %c0 = arith.constant 0 : index
    %c0_0 = arith.constant 0 : index
    %1 = vector.load %arg7[%c0, %c0_0] : memref<4x10xf32, #tpu.memory_space<vmem>>, vector<4x10xf32>
    tpu.vector_store %arg7[%c0, %c0_0], %0 {strides = array<i32>} : memref<4x10xf32, #tpu.memory_space<vmem>>, vector<4x10xf32>,
    %c0_1 = arith.constant 0 : index
    %c0_2 = arith.constant 0 : index
    %c0_3 = arith.constant 0 : index
    %2 = vector.load %arg1[%c0_1, %c0_2, %c0_3] : memref<1x4x8xf32, #tpu.memory_space<vmem>>, vector<1x4x8xf32>
    %3 = vector.shape_cast %2 : vector<1x4x8xf32> to vector<4x8xf32>
    %c0_4 = arith.constant 0 : index
    %c1 = arith.constant 1 : index
    %4 = vector.load %arg7[%c0_4, %c1] : memref<4x10xf32, #tpu.memory_space<vmem>>, vector<4x8xf32>
    tpu.vector_store %arg7[%c0_4, %c1], %3 {strides = array<i32>} : memref<4x10xf32, #tpu.memory_space<vmem>>, vector<4x8xf32>,
    %cst_5 = arith.constant 0.000000e+00 : f32
    %5 = vector.broadcast %cst_5 : f32 to vector<10x11xf32>
    %c0_6 = arith.constant 0 : index
    %c0_7 = arith.constant 0 : index
    %6 = vector.load %arg8[%c0_6, %c0_7] : memref<10x11xf32, #tpu.memory_space<vmem>>, vector<10x11xf32>
    tpu.vector_store %arg8[%c0_6, %c0_7], %5 {strides = array<i32>} : memref<10x11xf32, #tpu.memory_space<vmem>>, vector<10x11xf32>,
    %c0_8 = arith.constant 0 : index
    %7 = memref.load %arg3[%c0_8] : memref<2xf32, #tpu.memory_space<smem>>
    %8 = vector.broadcast %7 : f32 to vector<1x9xf32>
    %c1_9 = arith.constant 1 : index
    %9 = memref.load %arg2[%c1_9] : memref<16xf32, #tpu.memory_space<smem>>
    %c0_10 = arith.constant 0 : index
    %c0_11 = arith.constant 0 : index
    %10 = vector.load %arg7[%c0_10, %c0_11] : memref<4x10xf32, #tpu.memory_space<vmem>>, vector<1x9xf32>
    %11 = vector.broadcast %9 : f32 to vector<1x9xf32>
    %12 = arith.mulf %10, %11 : vector<1x9xf32>
    %13 = arith.addf %8, %12 : vector<1x9xf32>
    %c2 = arith.constant 2 : index
    %14 = memref.load %arg2[%c2] : memref<16xf32, #tpu.memory_space<smem>>
    %c1_12 = arith.constant 1 : index
    %c0_13 = arith.constant 0 : index
    %15 = vector.load %arg7[%c1_12, %c0_13] : memref<4x10xf32, #tpu.memory_space<vmem>>, vector<1x9xf32>
    %16 = vector.broadcast %14 : f32 to vector<1x9xf32>
    %17 = arith.mulf %15, %16 : vector<1x9xf32>
    %18 = arith.addf %13, %17 : vector<1x9xf32>
    %c3 = arith.constant 3 : index
    %19 = memref.load %arg2[%c3] : memref<16xf32, #tpu.memory_space<smem>>
    %c2_14 = arith.constant 2 : index
    %c0_15 = arith.constant 0 : index
    %20 = vector.load %arg7[%c2_14, %c0_15] : memref<4x10xf32, #tpu.memory_space<vmem>>, vector<1x9xf32>
    %21 = vector.broadcast %19 : f32 to vector<1x9xf32>
    %22 = arith.mulf %20, %21 : vector<1x9xf32>
    %23 = arith.addf %18, %22 : vector<1x9xf32>
    %c5 = arith.constant 5 : index
    %24 = memref.load %arg2[%c5] : memref<16xf32, #tpu.memory_space<smem>>
    %c0_16 = arith.constant 0 : index
    %c1_17 = arith.constant 1 : index
    %25 = vector.load %arg7[%c0_16, %c1_17] : memref<4x10xf32, #tpu.memory_space<vmem>>, vector<1x9xf32>
    %26 = vector.broadcast %24 : f32 to vector<1x9xf32>
    %27 = arith.mulf %25, %26 : vector<1x9xf32>
    %28 = arith.addf %23, %27 : vector<1x9xf32>
    %c6 = arith.constant 6 : index
    %29 = memref.load %arg2[%c6] : memref<16xf32, #tpu.memory_space<smem>>
    %c1_18 = arith.constant 1 : index
    %c1_19 = arith.constant 1 : index
    %30 = vector.load %arg7[%c1_18, %c1_19] : memref<4x10xf32, #tpu.memory_space<vmem>>, vector<1x9xf32>
    %31 = vector.broadcast %29 : f32 to vector<1x9xf32>
    %32 = arith.mulf %30, %31 : vector<1x9xf32>
    %33 = arith.addf %28, %32 : vector<1x9xf32>
    %c7 = arith.constant 7 : index
    %34 = memref.load %arg2[%c7] : memref<16xf32, #tpu.memory_space<smem>>
    %c2_20 = arith.constant 2 : index
    %c1_21 = arith.constant 1 : index
    %35 = vector.load %arg7[%c2_20, %c1_21] : memref<4x10xf32, #tpu.memory_space<vmem>>, vector<1x9xf32>
    %36 = vector.broadcast %34 : f32 to vector<1x9xf32>
    %37 = arith.mulf %35, %36 : vector<1x9xf32>
    %38 = arith.addf %33, %37 : vector<1x9xf32>
    %cst_22 = arith.constant 0.000000e+00 : f32
    %39 = vector.broadcast %cst_22 : f32 to vector<1x9xf32>
    %40 = arith.maximumf %38, %39 : vector<1x9xf32>
    %c1_23 = arith.constant 1 : index
    %c1_24 = arith.constant 1 : index
    %41 = vector.load %arg8[%c1_23, %c1_24] : memref<10x11xf32, #tpu.memory_space<vmem>>, vector<1x9xf32>
    tpu.vector_store %arg8[%c1_23, %c1_24], %40 {strides = array<i32>} : memref<10x11xf32, #tpu.memory_space<vmem>>, vector<1x9xf32>,
    %c0_25 = arith.constant 0 : index
    %42 = memref.load %arg3[%c0_25] : memref<2xf32, #tpu.memory_space<smem>>
    %43 = vector.broadcast %42 : f32 to vector<1x9xf32>
    %c0_26 = arith.constant 0 : index
    %44 = memref.load %arg2[%c0_26] : memref<16xf32, #tpu.memory_space<smem>>
    %c0_27 = arith.constant 0 : index
    %c0_28 = arith.constant 0 : index
    %45 = vector.load %arg7[%c0_27, %c0_28] : memref<4x10xf32, #tpu.memory_space<vmem>>, vector<1x9xf32>
    %46 = vector.broadcast %44 : f32 to vector<1x9xf32>
    %47 = arith.mulf %45, %46 : vector<1x9xf32>
    %48 = arith.addf %43, %47 : vector<1x9xf32>
    %c1_29 = arith.constant 1 : index
    %49 = memref.load %arg2[%c1_29] : memref<16xf32, #tpu.memory_space<smem>>
    %c1_30 = arith.constant 1 : index
    %c0_31 = arith.constant 0 : index
    %50 = vector.load %arg7[%c1_30, %c0_31] : memref<4x10xf32, #tpu.memory_space<vmem>>, vector<1x9xf32>
    %51 = vector.broadcast %49 : f32 to vector<1x9xf32>
    %52 = arith.mulf %50, %51 : vector<1x9xf32>
    %53 = arith.addf %48, %52 : vector<1x9xf32>
    %c2_32 = arith.constant 2 : index
    %54 = memref.load %arg2[%c2_32] : memref<16xf32, #tpu.memory_space<smem>>
    %c2_33 = arith.constant 2 : index
    %c0_34 = arith.constant 0 : index
    %55 = vector.load %arg7[%c2_33, %c0_34] : memref<4x10xf32, #tpu.memory_space<vmem>>, vector<1x9xf32>
    %56 = vector.broadcast %54 : f32 to vector<1x9xf32>
    %57 = arith.mulf %55, %56 : vector<1x9xf32>
    %58 = arith.addf %53, %57 : vector<1x9xf32>
    %c3_35 = arith.constant 3 : index
    %59 = memref.load %arg2[%c3_35] : memref<16xf32, #tpu.memory_space<smem>>
    %c3_36 = arith.constant 3 : index
    %c0_37 = arith.constant 0 : index
    %60 = vector.load %arg7[%c3_36, %c0_37] : memref<4x10xf32, #tpu.memory_space<vmem>>, vector<1x9xf32>
    %61 = vector.broadcast %59 : f32 to vector<1x9xf32>
    %62 = arith.mulf %60, %61 : vector<1x9xf32>
    %63 = arith.addf %58, %62 : vector<1x9xf32>
    %c4 = arith.constant 4 : index
    %64 = memref.load %arg2[%c4] : memref<16xf32, #tpu.memory_space<smem>>
    %c0_38 = arith.constant 0 : index
    %c1_39 = arith.constant 1 : index
    %65 = vector.load %arg7[%c0_38, %c1_39] : memref<4x10xf32, #tpu.memory_space<vmem>>, vector<1x9xf32>
    %66 = vector.broadcast %64 : f32 to vector<1x9xf32>
    %67 = arith.mulf %65, %66 : vector<1x9xf32>
    %68 = arith.addf %63, %67 : vector<1x9xf32>
    %c5_40 = arith.constant 5 : index
    %69 = memref.load %arg2[%c5_40] : memref<16xf32, #tpu.memory_space<smem>>
    %c1_41 = arith.constant 1 : index
    %c1_42 = arith.constant 1 : index
    %70 = vector.load %arg7[%c1_41, %c1_42] : memref<4x10xf32, #tpu.memory_space<vmem>>, vector<1x9xf32>
    %71 = vector.broadcast %69 : f32 to vector<1x9xf32>
    %72 = arith.mulf %70, %71 : vector<1x9xf32>
    %73 = arith.addf %68, %72 : vector<1x9xf32>
    %c6_43 = arith.constant 6 : index
    %74 = memref.load %arg2[%c6_43] : memref<16xf32, #tpu.memory_space<smem>>
    %c2_44 = arith.constant 2 : index
    %c1_45 = arith.constant 1 : index
    %75 = vector.load %arg7[%c2_44, %c1_45] : memref<4x10xf32, #tpu.memory_space<vmem>>, vector<1x9xf32>
    %76 = vector.broadcast %74 : f32 to vector<1x9xf32>
    %77 = arith.mulf %75, %76 : vector<1x9xf32>
    %78 = arith.addf %73, %77 : vector<1x9xf32>
    %c7_46 = arith.constant 7 : index
    %79 = memref.load %arg2[%c7_46] : memref<16xf32, #tpu.memory_space<smem>>
    %c3_47 = arith.constant 3 : index
    %c1_48 = arith.constant 1 : index
    %80 = vector.load %arg7[%c3_47, %c1_48] : memref<4x10xf32, #tpu.memory_space<vmem>>, vector<1x9xf32>
    %81 = vector.broadcast %79 : f32 to vector<1x9xf32>
    %82 = arith.mulf %80, %81 : vector<1x9xf32>
    %83 = arith.addf %78, %82 : vector<1x9xf32>
    %cst_49 = arith.constant 0.000000e+00 : f32
    %84 = vector.broadcast %cst_49 : f32 to vector<1x9xf32>
    %85 = arith.maximumf %83, %84 : vector<1x9xf32>
    %c2_50 = arith.constant 2 : index
    %c1_51 = arith.constant 1 : index
    %86 = vector.load %arg8[%c2_50, %c1_51] : memref<10x11xf32, #tpu.memory_space<vmem>>, vector<1x9xf32>
    tpu.vector_store %arg8[%c2_50, %c1_51], %85 {strides = array<i32>} : memref<10x11xf32, #tpu.memory_space<vmem>>, vector<1x9xf32>,
    %c0_52 = arith.constant 0 : index
    %87 = memref.load %arg3[%c0_52] : memref<2xf32, #tpu.memory_space<smem>>
    %88 = vector.broadcast %87 : f32 to vector<1x9xf32>
    %c0_53 = arith.constant 0 : index
    %89 = memref.load %arg2[%c0_53] : memref<16xf32, #tpu.memory_space<smem>>
    %c1_54 = arith.constant 1 : index
    %c0_55 = arith.constant 0 : index
    %90 = vector.load %arg7[%c1_54, %c0_55] : memref<4x10xf32, #tpu.memory_space<vmem>>, vector<1x9xf32>
    %91 = vector.broadcast %89 : f32 to vector<1x9xf32>
    %92 = arith.mulf %90, %91 : vector<1x9xf32>
    %93 = arith.addf %88, %92 : vector<1x9xf32>
    %c1_56 = arith.constant 1 : index
    %94 = memref.load %arg2[%c1_56] : memref<16xf32, #tpu.memory_space<smem>>
    %c2_57 = arith.constant 2 : index
    %c0_58 = arith.constant 0 : index
    %95 = vector.load %arg7[%c2_57, %c0_58] : memref<4x10xf32, #tpu.memory_space<vmem>>, vector<1x9xf32>
    %96 = vector.broadcast %94 : f32 to vector<1x9xf32>
    %97 = arith.mulf %95, %96 : vector<1x9xf32>
    %98 = arith.addf %93, %97 : vector<1x9xf32>
    %c2_59 = arith.constant 2 : index
    %99 = memref.load %arg2[%c2_59] : memref<16xf32, #tpu.memory_space<smem>>
    %c3_60 = arith.constant 3 : index
    %c0_61 = arith.constant 0 : index
    %100 = vector.load %arg7[%c3_60, %c0_61] : memref<4x10xf32, #tpu.memory_space<vmem>>, vector<1x9xf32>
    %101 = vector.broadcast %99 : f32 to vector<1x9xf32>
    %102 = arith.mulf %100, %101 : vector<1x9xf32>
    %103 = arith.addf %98, %102 : vector<1x9xf32>
    %c4_62 = arith.constant 4 : index
    %104 = memref.load %arg2[%c4_62] : memref<16xf32, #tpu.memory_space<smem>>
    %c1_63 = arith.constant 1 : index
    %c1_64 = arith.constant 1 : index
    %105 = vector.load %arg7[%c1_63, %c1_64] : memref<4x10xf32, #tpu.memory_space<vmem>>, vector<1x9xf32>
    %106 = vector.broadcast %104 : f32 to vector<1x9xf32>
    %107 = arith.mulf %105, %106 : vector<1x9xf32>
    %108 = arith.addf %103, %107 : vector<1x9xf32>
    %c5_65 = arith.constant 5 : index
    %109 = memref.load %arg2[%c5_65] : memref<16xf32, #tpu.memory_space<smem>>
    %c2_66 = arith.constant 2 : index
    %c1_67 = arith.constant 1 : index
    %110 = vector.load %arg7[%c2_66, %c1_67] : memref<4x10xf32, #tpu.memory_space<vmem>>, vector<1x9xf32>
    %111 = vector.broadcast %109 : f32 to vector<1x9xf32>
    %112 = arith.mulf %110, %111 : vector<1x9xf32>
    %113 = arith.addf %108, %112 : vector<1x9xf32>
    %c6_68 = arith.constant 6 : index
    %114 = memref.load %arg2[%c6_68] : memref<16xf32, #tpu.memory_space<smem>>
    %c3_69 = arith.constant 3 : index
    %c1_70 = arith.constant 1 : index
    %115 = vector.load %arg7[%c3_69, %c1_70] : memref<4x10xf32, #tpu.memory_space<vmem>>, vector<1x9xf32>
    %116 = vector.broadcast %114 : f32 to vector<1x9xf32>
    %117 = arith.mulf %115, %116 : vector<1x9xf32>
    %118 = arith.addf %113, %117 : vector<1x9xf32>
    %cst_71 = arith.constant 0.000000e+00 : f32
    %119 = vector.broadcast %cst_71 : f32 to vector<1x9xf32>
    %120 = arith.maximumf %118, %119 : vector<1x9xf32>
    %c3_72 = arith.constant 3 : index
    %c1_73 = arith.constant 1 : index
    %121 = vector.load %arg8[%c3_72, %c1_73] : memref<10x11xf32, #tpu.memory_space<vmem>>, vector<1x9xf32>
    tpu.vector_store %arg8[%c3_72, %c1_73], %120 {strides = array<i32>} : memref<10x11xf32, #tpu.memory_space<vmem>>, vector<1x9xf32>,
    %c1_74 = arith.constant 1 : index
    %122 = memref.load %arg3[%c1_74] : memref<2xf32, #tpu.memory_space<smem>>
    %123 = vector.broadcast %122 : f32 to vector<1x9xf32>
    %c9 = arith.constant 9 : index
    %124 = memref.load %arg2[%c9] : memref<16xf32, #tpu.memory_space<smem>>
    %c0_75 = arith.constant 0 : index
    %c0_76 = arith.constant 0 : index
    %125 = vector.load %arg7[%c0_75, %c0_76] : memref<4x10xf32, #tpu.memory_space<vmem>>, vector<1x9xf32>
    %126 = vector.broadcast %124 : f32 to vector<1x9xf32>
    %127 = arith.mulf %125, %126 : vector<1x9xf32>
    %128 = arith.addf %123, %127 : vector<1x9xf32>
    %c10 = arith.constant 10 : index
    %129 = memref.load %arg2[%c10] : memref<16xf32, #tpu.memory_space<smem>>
    %c1_77 = arith.constant 1 : index
    %c0_78 = arith.constant 0 : index
    %130 = vector.load %arg7[%c1_77, %c0_78] : memref<4x10xf32, #tpu.memory_space<vmem>>, vector<1x9xf32>
    %131 = vector.broadcast %129 : f32 to vector<1x9xf32>
    %132 = arith.mulf %130, %131 : vector<1x9xf32>
    %133 = arith.addf %128, %132 : vector<1x9xf32>
    %c11 = arith.constant 11 : index
    %134 = memref.load %arg2[%c11] : memref<16xf32, #tpu.memory_space<smem>>
    %c2_79 = arith.constant 2 : index
    %c0_80 = arith.constant 0 : index
    %135 = vector.load %arg7[%c2_79, %c0_80] : memref<4x10xf32, #tpu.memory_space<vmem>>, vector<1x9xf32>
    %136 = vector.broadcast %134 : f32 to vector<1x9xf32>
    %137 = arith.mulf %135, %136 : vector<1x9xf32>
    %138 = arith.addf %133, %137 : vector<1x9xf32>
    %c13 = arith.constant 13 : index
    %139 = memref.load %arg2[%c13] : memref<16xf32, #tpu.memory_space<smem>>
    %c0_81 = arith.constant 0 : index
    %c1_82 = arith.constant 1 : index
    %140 = vector.load %arg7[%c0_81, %c1_82] : memref<4x10xf32, #tpu.memory_space<vmem>>, vector<1x9xf32>
    %141 = vector.broadcast %139 : f32 to vector<1x9xf32>
    %142 = arith.mulf %140, %141 : vector<1x9xf32>
    %143 = arith.addf %138, %142 : vector<1x9xf32>
    %c14 = arith.constant 14 : index
    %144 = memref.load %arg2[%c14] : memref<16xf32, #tpu.memory_space<smem>>
    %c1_83 = arith.constant 1 : index
    %c1_84 = arith.constant 1 : index
    %145 = vector.load %arg7[%c1_83, %c1_84] : memref<4x10xf32, #tpu.memory_space<vmem>>, vector<1x9xf32>
    %146 = vector.broadcast %144 : f32 to vector<1x9xf32>
    %147 = arith.mulf %145, %146 : vector<1x9xf32>
    %148 = arith.addf %143, %147 : vector<1x9xf32>
    %c15 = arith.constant 15 : index
    %149 = memref.load %arg2[%c15] : memref<16xf32, #tpu.memory_space<smem>>
    %c2_85 = arith.constant 2 : index
    %c1_86 = arith.constant 1 : index
    %150 = vector.load %arg7[%c2_85, %c1_86] : memref<4x10xf32, #tpu.memory_space<vmem>>, vector<1x9xf32>
    %151 = vector.broadcast %149 : f32 to vector<1x9xf32>
    %152 = arith.mulf %150, %151 : vector<1x9xf32>
    %153 = arith.addf %148, %152 : vector<1x9xf32>
    %cst_87 = arith.constant 0.000000e+00 : f32
    %154 = vector.broadcast %cst_87 : f32 to vector<1x9xf32>
    %155 = arith.maximumf %153, %154 : vector<1x9xf32>
    %c6_88 = arith.constant 6 : index
    %c1_89 = arith.constant 1 : index
    %156 = vector.load %arg8[%c6_88, %c1_89] : memref<10x11xf32, #tpu.memory_space<vmem>>, vector<1x9xf32>
    tpu.vector_store %arg8[%c6_88, %c1_89], %155 {strides = array<i32>} : memref<10x11xf32, #tpu.memory_space<vmem>>, vector<1x9xf32>,
    %c1_90 = arith.constant 1 : index
    %157 = memref.load %arg3[%c1_90] : memref<2xf32, #tpu.memory_space<smem>>
    %158 = vector.broadcast %157 : f32 to vector<1x9xf32>
    %c8 = arith.constant 8 : index
    %159 = memref.load %arg2[%c8] : memref<16xf32, #tpu.memory_space<smem>>
    %c0_91 = arith.constant 0 : index
    %c0_92 = arith.constant 0 : index
    %160 = vector.load %arg7[%c0_91, %c0_92] : memref<4x10xf32, #tpu.memory_space<vmem>>, vector<1x9xf32>
    %161 = vector.broadcast %159 : f32 to vector<1x9xf32>
    %162 = arith.mulf %160, %161 : vector<1x9xf32>
    %163 = arith.addf %158, %162 : vector<1x9xf32>
    %c9_93 = arith.constant 9 : index
    %164 = memref.load %arg2[%c9_93] : memref<16xf32, #tpu.memory_space<smem>>
    %c1_94 = arith.constant 1 : index
    %c0_95 = arith.constant 0 : index
    %165 = vector.load %arg7[%c1_94, %c0_95] : memref<4x10xf32, #tpu.memory_space<vmem>>, vector<1x9xf32>
    %166 = vector.broadcast %164 : f32 to vector<1x9xf32>
    %167 = arith.mulf %165, %166 : vector<1x9xf32>
    %168 = arith.addf %163, %167 : vector<1x9xf32>
    %c10_96 = arith.constant 10 : index
    %169 = memref.load %arg2[%c10_96] : memref<16xf32, #tpu.memory_space<smem>>
    %c2_97 = arith.constant 2 : index
    %c0_98 = arith.constant 0 : index
    %170 = vector.load %arg7[%c2_97, %c0_98] : memref<4x10xf32, #tpu.memory_space<vmem>>, vector<1x9xf32>
    %171 = vector.broadcast %169 : f32 to vector<1x9xf32>
    %172 = arith.mulf %170, %171 : vector<1x9xf32>
    %173 = arith.addf %168, %172 : vector<1x9xf32>
    %c11_99 = arith.constant 11 : index
    %174 = memref.load %arg2[%c11_99] : memref<16xf32, #tpu.memory_space<smem>>
    %c3_100 = arith.constant 3 : index
    %c0_101 = arith.constant 0 : index
    %175 = vector.load %arg7[%c3_100, %c0_101] : memref<4x10xf32, #tpu.memory_space<vmem>>, vector<1x9xf32>
    %176 = vector.broadcast %174 : f32 to vector<1x9xf32>
    %177 = arith.mulf %175, %176 : vector<1x9xf32>
    %178 = arith.addf %173, %177 : vector<1x9xf32>
    %c12 = arith.constant 12 : index
    %179 = memref.load %arg2[%c12] : memref<16xf32, #tpu.memory_space<smem>>
    %c0_102 = arith.constant 0 : index
    %c1_103 = arith.constant 1 : index
    %180 = vector.load %arg7[%c0_102, %c1_103] : memref<4x10xf32, #tpu.memory_space<vmem>>, vector<1x9xf32>
    %181 = vector.broadcast %179 : f32 to vector<1x9xf32>
    %182 = arith.mulf %180, %181 : vector<1x9xf32>
    %183 = arith.addf %178, %182 : vector<1x9xf32>
    %c13_104 = arith.constant 13 : index
    %184 = memref.load %arg2[%c13_104] : memref<16xf32, #tpu.memory_space<smem>>
    %c1_105 = arith.constant 1 : index
    %c1_106 = arith.constant 1 : index
    %185 = vector.load %arg7[%c1_105, %c1_106] : memref<4x10xf32, #tpu.memory_space<vmem>>, vector<1x9xf32>
    %186 = vector.broadcast %184 : f32 to vector<1x9xf32>
    %187 = arith.mulf %185, %186 : vector<1x9xf32>
    %188 = arith.addf %183, %187 : vector<1x9xf32>
    %c14_107 = arith.constant 14 : index
    %189 = memref.load %arg2[%c14_107] : memref<16xf32, #tpu.memory_space<smem>>
    %c2_108 = arith.constant 2 : index
    %c1_109 = arith.constant 1 : index
    %190 = vector.load %arg7[%c2_108, %c1_109] : memref<4x10xf32, #tpu.memory_space<vmem>>, vector<1x9xf32>
    %191 = vector.broadcast %189 : f32 to vector<1x9xf32>
    %192 = arith.mulf %190, %191 : vector<1x9xf32>
    %193 = arith.addf %188, %192 : vector<1x9xf32>
    %c15_110 = arith.constant 15 : index
    %194 = memref.load %arg2[%c15_110] : memref<16xf32, #tpu.memory_space<smem>>
    %c3_111 = arith.constant 3 : index
    %c1_112 = arith.constant 1 : index
    %195 = vector.load %arg7[%c3_111, %c1_112] : memref<4x10xf32, #tpu.memory_space<vmem>>, vector<1x9xf32>
    %196 = vector.broadcast %194 : f32 to vector<1x9xf32>
    %197 = arith.mulf %195, %196 : vector<1x9xf32>
    %198 = arith.addf %193, %197 : vector<1x9xf32>
    %cst_113 = arith.constant 0.000000e+00 : f32
    %199 = vector.broadcast %cst_113 : f32 to vector<1x9xf32>
    %200 = arith.maximumf %198, %199 : vector<1x9xf32>
    %c7_114 = arith.constant 7 : index
    %c1_115 = arith.constant 1 : index
    %201 = vector.load %arg8[%c7_114, %c1_115] : memref<10x11xf32, #tpu.memory_space<vmem>>, vector<1x9xf32>
    tpu.vector_store %arg8[%c7_114, %c1_115], %200 {strides = array<i32>} : memref<10x11xf32, #tpu.memory_space<vmem>>, vector<1x9xf32>,
    %c1_116 = arith.constant 1 : index
    %202 = memref.load %arg3[%c1_116] : memref<2xf32, #tpu.memory_space<smem>>
    %203 = vector.broadcast %202 : f32 to vector<1x9xf32>
    %c8_117 = arith.constant 8 : index
    %204 = memref.load %arg2[%c8_117] : memref<16xf32, #tpu.memory_space<smem>>
    %c1_118 = arith.constant 1 : index
    %c0_119 = arith.constant 0 : index
    %205 = vector.load %arg7[%c1_118, %c0_119] : memref<4x10xf32, #tpu.memory_space<vmem>>, vector<1x9xf32>
    %206 = vector.broadcast %204 : f32 to vector<1x9xf32>
    %207 = arith.mulf %205, %206 : vector<1x9xf32>
    %208 = arith.addf %203, %207 : vector<1x9xf32>
    %c9_120 = arith.constant 9 : index
    %209 = memref.load %arg2[%c9_120] : memref<16xf32, #tpu.memory_space<smem>>
    %c2_121 = arith.constant 2 : index
    %c0_122 = arith.constant 0 : index
    %210 = vector.load %arg7[%c2_121, %c0_122] : memref<4x10xf32, #tpu.memory_space<vmem>>, vector<1x9xf32>
    %211 = vector.broadcast %209 : f32 to vector<1x9xf32>
    %212 = arith.mulf %210, %211 : vector<1x9xf32>
    %213 = arith.addf %208, %212 : vector<1x9xf32>
    %c10_123 = arith.constant 10 : index
    %214 = memref.load %arg2[%c10_123] : memref<16xf32, #tpu.memory_space<smem>>
    %c3_124 = arith.constant 3 : index
    %c0_125 = arith.constant 0 : index
    %215 = vector.load %arg7[%c3_124, %c0_125] : memref<4x10xf32, #tpu.memory_space<vmem>>, vector<1x9xf32>
    %216 = vector.broadcast %214 : f32 to vector<1x9xf32>
    %217 = arith.mulf %215, %216 : vector<1x9xf32>
    %218 = arith.addf %213, %217 : vector<1x9xf32>
    %c12_126 = arith.constant 12 : index
    %219 = memref.load %arg2[%c12_126] : memref<16xf32, #tpu.memory_space<smem>>
    %c1_127 = arith.constant 1 : index
    %c1_128 = arith.constant 1 : index
    %220 = vector.load %arg7[%c1_127, %c1_128] : memref<4x10xf32, #tpu.memory_space<vmem>>, vector<1x9xf32>
    %221 = vector.broadcast %219 : f32 to vector<1x9xf32>
    %222 = arith.mulf %220, %221 : vector<1x9xf32>
    %223 = arith.addf %218, %222 : vector<1x9xf32>
    %c13_129 = arith.constant 13 : index
    %224 = memref.load %arg2[%c13_129] : memref<16xf32, #tpu.memory_space<smem>>
    %c2_130 = arith.constant 2 : index
    %c1_131 = arith.constant 1 : index
    %225 = vector.load %arg7[%c2_130, %c1_131] : memref<4x10xf32, #tpu.memory_space<vmem>>, vector<1x9xf32>
    %226 = vector.broadcast %224 : f32 to vector<1x9xf32>
    %227 = arith.mulf %225, %226 : vector<1x9xf32>
    %228 = arith.addf %223, %227 : vector<1x9xf32>
    %c14_132 = arith.constant 14 : index
    %229 = memref.load %arg2[%c14_132] : memref<16xf32, #tpu.memory_space<smem>>
    %c3_133 = arith.constant 3 : index
    %c1_134 = arith.constant 1 : index
    %230 = vector.load %arg7[%c3_133, %c1_134] : memref<4x10xf32, #tpu.memory_space<vmem>>, vector<1x9xf32>
    %231 = vector.broadcast %229 : f32 to vector<1x9xf32>
    %232 = arith.mulf %230, %231 : vector<1x9xf32>
    %233 = arith.addf %228, %232 : vector<1x9xf32>
    %cst_135 = arith.constant 0.000000e+00 : f32
    %234 = vector.broadcast %cst_135 : f32 to vector<1x9xf32>
    %235 = arith.maximumf %233, %234 : vector<1x9xf32>
    %c8_136 = arith.constant 8 : index
    %c1_137 = arith.constant 1 : index
    %236 = vector.load %arg8[%c8_136, %c1_137] : memref<10x11xf32, #tpu.memory_space<vmem>>, vector<1x9xf32>
    tpu.vector_store %arg8[%c8_136, %c1_137], %235 {strides = array<i32>} : memref<10x11xf32, #tpu.memory_space<vmem>>, vector<1x9xf32>,
    %c0_138 = arith.constant 0 : index
    %237 = memref.load %arg5[%c0_138] : memref<1xf32, #tpu.memory_space<smem>>
    %238 = vector.broadcast %237 : f32 to vector<1x9xf32>
    %c0_139 = arith.constant 0 : index
    %239 = memref.load %arg4[%c0_139] : memref<24xf32, #tpu.memory_space<smem>>
    %c0_140 = arith.constant 0 : index
    %c0_141 = arith.constant 0 : index
    %240 = vector.load %arg8[%c0_140, %c0_141] : memref<10x11xf32, #tpu.memory_space<vmem>>, vector<1x9xf32>
    %241 = vector.broadcast %239 : f32 to vector<1x9xf32>
    %242 = arith.mulf %240, %241 : vector<1x9xf32>
    %243 = arith.addf %238, %242 : vector<1x9xf32>
    %c1_142 = arith.constant 1 : index
    %244 = memref.load %arg4[%c1_142] : memref<24xf32, #tpu.memory_space<smem>>
    %c1_143 = arith.constant 1 : index
    %c0_144 = arith.constant 0 : index
    %245 = vector.load %arg8[%c1_143, %c0_144] : memref<10x11xf32, #tpu.memory_space<vmem>>, vector<1x9xf32>
    %246 = vector.broadcast %244 : f32 to vector<1x9xf32>
    %247 = arith.mulf %245, %246 : vector<1x9xf32>
    %248 = arith.addf %243, %247 : vector<1x9xf32>
    %c2_145 = arith.constant 2 : index
    %249 = memref.load %arg4[%c2_145] : memref<24xf32, #tpu.memory_space<smem>>
    %c2_146 = arith.constant 2 : index
    %c0_147 = arith.constant 0 : index
    %250 = vector.load %arg8[%c2_146, %c0_147] : memref<10x11xf32, #tpu.memory_space<vmem>>, vector<1x9xf32>
    %251 = vector.broadcast %249 : f32 to vector<1x9xf32>
    %252 = arith.mulf %250, %251 : vector<1x9xf32>
    %253 = arith.addf %248, %252 : vector<1x9xf32>
    %c3_148 = arith.constant 3 : index
    %254 = memref.load %arg4[%c3_148] : memref<24xf32, #tpu.memory_space<smem>>
    %c3_149 = arith.constant 3 : index
    %c0_150 = arith.constant 0 : index
    %255 = vector.load %arg8[%c3_149, %c0_150] : memref<10x11xf32, #tpu.memory_space<vmem>>, vector<1x9xf32>
    %256 = vector.broadcast %254 : f32 to vector<1x9xf32>
    %257 = arith.mulf %255, %256 : vector<1x9xf32>
    %258 = arith.addf %253, %257 : vector<1x9xf32>
    %c4_151 = arith.constant 4 : index
    %259 = memref.load %arg4[%c4_151] : memref<24xf32, #tpu.memory_space<smem>>
    %c0_152 = arith.constant 0 : index
    %c1_153 = arith.constant 1 : index
    %260 = vector.load %arg8[%c0_152, %c1_153] : memref<10x11xf32, #tpu.memory_space<vmem>>, vector<1x9xf32>
    %261 = vector.broadcast %259 : f32 to vector<1x9xf32>
    %262 = arith.mulf %260, %261 : vector<1x9xf32>
    %263 = arith.addf %258, %262 : vector<1x9xf32>
    %c5_154 = arith.constant 5 : index
    %264 = memref.load %arg4[%c5_154] : memref<24xf32, #tpu.memory_space<smem>>
    %c1_155 = arith.constant 1 : index
    %c1_156 = arith.constant 1 : index
    %265 = vector.load %arg8[%c1_155, %c1_156] : memref<10x11xf32, #tpu.memory_space<vmem>>, vector<1x9xf32>
    %266 = vector.broadcast %264 : f32 to vector<1x9xf32>
    %267 = arith.mulf %265, %266 : vector<1x9xf32>
    %268 = arith.addf %263, %267 : vector<1x9xf32>
    %c6_157 = arith.constant 6 : index
    %269 = memref.load %arg4[%c6_157] : memref<24xf32, #tpu.memory_space<smem>>
    %c2_158 = arith.constant 2 : index
    %c1_159 = arith.constant 1 : index
    %270 = vector.load %arg8[%c2_158, %c1_159] : memref<10x11xf32, #tpu.memory_space<vmem>>, vector<1x9xf32>
    %271 = vector.broadcast %269 : f32 to vector<1x9xf32>
    %272 = arith.mulf %270, %271 : vector<1x9xf32>
    %273 = arith.addf %268, %272 : vector<1x9xf32>
    %c7_160 = arith.constant 7 : index
    %274 = memref.load %arg4[%c7_160] : memref<24xf32, #tpu.memory_space<smem>>
    %c3_161 = arith.constant 3 : index
    %c1_162 = arith.constant 1 : index
    %275 = vector.load %arg8[%c3_161, %c1_162] : memref<10x11xf32, #tpu.memory_space<vmem>>, vector<1x9xf32>
    %276 = vector.broadcast %274 : f32 to vector<1x9xf32>
    %277 = arith.mulf %275, %276 : vector<1x9xf32>
    %278 = arith.addf %273, %277 : vector<1x9xf32>
    %c8_163 = arith.constant 8 : index
    %279 = memref.load %arg4[%c8_163] : memref<24xf32, #tpu.memory_space<smem>>
    %c0_164 = arith.constant 0 : index
    %c2_165 = arith.constant 2 : index
    %280 = vector.load %arg8[%c0_164, %c2_165] : memref<10x11xf32, #tpu.memory_space<vmem>>, vector<1x9xf32>
    %281 = vector.broadcast %279 : f32 to vector<1x9xf32>
    %282 = arith.mulf %280, %281 : vector<1x9xf32>
    %283 = arith.addf %278, %282 : vector<1x9xf32>
    %c9_166 = arith.constant 9 : index
    %284 = memref.load %arg4[%c9_166] : memref<24xf32, #tpu.memory_space<smem>>
    %c1_167 = arith.constant 1 : index
    %c2_168 = arith.constant 2 : index
    %285 = vector.load %arg8[%c1_167, %c2_168] : memref<10x11xf32, #tpu.memory_space<vmem>>, vector<1x9xf32>
    %286 = vector.broadcast %284 : f32 to vector<1x9xf32>
    %287 = arith.mulf %285, %286 : vector<1x9xf32>
    %288 = arith.addf %283, %287 : vector<1x9xf32>
    %c10_169 = arith.constant 10 : index
    %289 = memref.load %arg4[%c10_169] : memref<24xf32, #tpu.memory_space<smem>>
    %c2_170 = arith.constant 2 : index
    %c2_171 = arith.constant 2 : index
    %290 = vector.load %arg8[%c2_170, %c2_171] : memref<10x11xf32, #tpu.memory_space<vmem>>, vector<1x9xf32>
    %291 = vector.broadcast %289 : f32 to vector<1x9xf32>
    %292 = arith.mulf %290, %291 : vector<1x9xf32>
    %293 = arith.addf %288, %292 : vector<1x9xf32>
    %c11_172 = arith.constant 11 : index
    %294 = memref.load %arg4[%c11_172] : memref<24xf32, #tpu.memory_space<smem>>
    %c3_173 = arith.constant 3 : index
    %c2_174 = arith.constant 2 : index
    %295 = vector.load %arg8[%c3_173, %c2_174] : memref<10x11xf32, #tpu.memory_space<vmem>>, vector<1x9xf32>
    %296 = vector.broadcast %294 : f32 to vector<1x9xf32>
    %297 = arith.mulf %295, %296 : vector<1x9xf32>
    %298 = arith.addf %293, %297 : vector<1x9xf32>
    %c12_175 = arith.constant 12 : index
    %299 = memref.load %arg4[%c12_175] : memref<24xf32, #tpu.memory_space<smem>>
    %c5_176 = arith.constant 5 : index
    %c0_177 = arith.constant 0 : index
    %300 = vector.load %arg8[%c5_176, %c0_177] : memref<10x11xf32, #tpu.memory_space<vmem>>, vector<1x9xf32>
    %301 = vector.broadcast %299 : f32 to vector<1x9xf32>
    %302 = arith.mulf %300, %301 : vector<1x9xf32>
    %303 = arith.addf %298, %302 : vector<1x9xf32>
    %c13_178 = arith.constant 13 : index
    %304 = memref.load %arg4[%c13_178] : memref<24xf32, #tpu.memory_space<smem>>
    %c6_179 = arith.constant 6 : index
    %c0_180 = arith.constant 0 : index
    %305 = vector.load %arg8[%c6_179, %c0_180] : memref<10x11xf32, #tpu.memory_space<vmem>>, vector<1x9xf32>
    %306 = vector.broadcast %304 : f32 to vector<1x9xf32>
    %307 = arith.mulf %305, %306 : vector<1x9xf32>
    %308 = arith.addf %303, %307 : vector<1x9xf32>
    %c14_181 = arith.constant 14 : index
    %309 = memref.load %arg4[%c14_181] : memref<24xf32, #tpu.memory_space<smem>>
    %c7_182 = arith.constant 7 : index
    %c0_183 = arith.constant 0 : index
    %310 = vector.load %arg8[%c7_182, %c0_183] : memref<10x11xf32, #tpu.memory_space<vmem>>, vector<1x9xf32>
    %311 = vector.broadcast %309 : f32 to vector<1x9xf32>
    %312 = arith.mulf %310, %311 : vector<1x9xf32>
    %313 = arith.addf %308, %312 : vector<1x9xf32>
    %c15_184 = arith.constant 15 : index
    %314 = memref.load %arg4[%c15_184] : memref<24xf32, #tpu.memory_space<smem>>
    %c8_185 = arith.constant 8 : index
    %c0_186 = arith.constant 0 : index
    %315 = vector.load %arg8[%c8_185, %c0_186] : memref<10x11xf32, #tpu.memory_space<vmem>>, vector<1x9xf32>
    %316 = vector.broadcast %314 : f32 to vector<1x9xf32>
    %317 = arith.mulf %315, %316 : vector<1x9xf32>
    %318 = arith.addf %313, %317 : vector<1x9xf32>
    %c16 = arith.constant 16 : index
    %319 = memref.load %arg4[%c16] : memref<24xf32, #tpu.memory_space<smem>>
    %c5_187 = arith.constant 5 : index
    %c1_188 = arith.constant 1 : index
    %320 = vector.load %arg8[%c5_187, %c1_188] : memref<10x11xf32, #tpu.memory_space<vmem>>, vector<1x9xf32>
    %321 = vector.broadcast %319 : f32 to vector<1x9xf32>
    %322 = arith.mulf %320, %321 : vector<1x9xf32>
    %323 = arith.addf %318, %322 : vector<1x9xf32>
    %c17 = arith.constant 17 : index
    %324 = memref.load %arg4[%c17] : memref<24xf32, #tpu.memory_space<smem>>
    %c6_189 = arith.constant 6 : index
    %c1_190 = arith.constant 1 : index
    %325 = vector.load %arg8[%c6_189, %c1_190] : memref<10x11xf32, #tpu.memory_space<vmem>>, vector<1x9xf32>
    %326 = vector.broadcast %324 : f32 to vector<1x9xf32>
    %327 = arith.mulf %325, %326 : vector<1x9xf32>
    %328 = arith.addf %323, %327 : vector<1x9xf32>
    %c18 = arith.constant 18 : index
    %329 = memref.load %arg4[%c18] : memref<24xf32, #tpu.memory_space<smem>>
    %c7_191 = arith.constant 7 : index
    %c1_192 = arith.constant 1 : index
    %330 = vector.load %arg8[%c7_191, %c1_192] : memref<10x11xf32, #tpu.memory_space<vmem>>, vector<1x9xf32>
    %331 = vector.broadcast %329 : f32 to vector<1x9xf32>
    %332 = arith.mulf %330, %331 : vector<1x9xf32>
    %333 = arith.addf %328, %332 : vector<1x9xf32>
    %c19 = arith.constant 19 : index
    %334 = memref.load %arg4[%c19] : memref<24xf32, #tpu.memory_space<smem>>
    %c8_193 = arith.constant 8 : index
    %c1_194 = arith.constant 1 : index
    %335 = vector.load %arg8[%c8_193, %c1_194] : memref<10x11xf32, #tpu.memory_space<vmem>>, vector<1x9xf32>
    %336 = vector.broadcast %334 : f32 to vector<1x9xf32>
    %337 = arith.mulf %335, %336 : vector<1x9xf32>
    %338 = arith.addf %333, %337 : vector<1x9xf32>
    %c20 = arith.constant 20 : index
    %339 = memref.load %arg4[%c20] : memref<24xf32, #tpu.memory_space<smem>>
    %c5_195 = arith.constant 5 : index
    %c2_196 = arith.constant 2 : index
    %340 = vector.load %arg8[%c5_195, %c2_196] : memref<10x11xf32, #tpu.memory_space<vmem>>, vector<1x9xf32>
    %341 = vector.broadcast %339 : f32 to vector<1x9xf32>
    %342 = arith.mulf %340, %341 : vector<1x9xf32>
    %343 = arith.addf %338, %342 : vector<1x9xf32>
    %c21 = arith.constant 21 : index
    %344 = memref.load %arg4[%c21] : memref<24xf32, #tpu.memory_space<smem>>
    %c6_197 = arith.constant 6 : index
    %c2_198 = arith.constant 2 : index
    %345 = vector.load %arg8[%c6_197, %c2_198] : memref<10x11xf32, #tpu.memory_space<vmem>>, vector<1x9xf32>
    %346 = vector.broadcast %344 : f32 to vector<1x9xf32>
    %347 = arith.mulf %345, %346 : vector<1x9xf32>
    %348 = arith.addf %343, %347 : vector<1x9xf32>
    %c22 = arith.constant 22 : index
    %349 = memref.load %arg4[%c22] : memref<24xf32, #tpu.memory_space<smem>>
    %c7_199 = arith.constant 7 : index
    %c2_200 = arith.constant 2 : index
    %350 = vector.load %arg8[%c7_199, %c2_200] : memref<10x11xf32, #tpu.memory_space<vmem>>, vector<1x9xf32>
    %351 = vector.broadcast %349 : f32 to vector<1x9xf32>
    %352 = arith.mulf %350, %351 : vector<1x9xf32>
    %353 = arith.addf %348, %352 : vector<1x9xf32>
    %c23 = arith.constant 23 : index
    %354 = memref.load %arg4[%c23] : memref<24xf32, #tpu.memory_space<smem>>
    %c8_201 = arith.constant 8 : index
    %c2_202 = arith.constant 2 : index
    %355 = vector.load %arg8[%c8_201, %c2_202] : memref<10x11xf32, #tpu.memory_space<vmem>>, vector<1x9xf32>
    %356 = vector.broadcast %354 : f32 to vector<1x9xf32>
    %357 = arith.mulf %355, %356 : vector<1x9xf32>
    %358 = arith.addf %353, %357 : vector<1x9xf32>
    %cst_203 = arith.constant 0.000000e+00 : f32
    %359 = vector.broadcast %cst_203 : f32 to vector<1x9xf32>
    %360 = arith.maximumf %358, %359 : vector<1x9xf32>
    %c0_204 = arith.constant 0 : index
    %c0_205 = arith.constant 0 : index
    %c0_206 = arith.constant 0 : index
    %361 = vector.load %arg6[%c0_204, %c0_205, %c0_206] : memref<1x2x9xf32, #tpu.memory_space<vmem>>, vector<1x1x9xf32>
    %362 = vector.shape_cast %361 : vector<1x1x9xf32> to vector<1x9xf32>
    %363 = vector.shape_cast %360 : vector<1x9xf32> to vector<1x1x9xf32>
    tpu.vector_store %arg6[%c0_204, %c0_205, %c0_206], %363 {strides = array<i32>} : memref<1x2x9xf32, #tpu.memory_space<vmem>>, vector<1x1x9xf32>,
    %c0_207 = arith.constant 0 : index
    %364 = memref.load %arg5[%c0_207] : memref<1xf32, #tpu.memory_space<smem>>
    %365 = vector.broadcast %364 : f32 to vector<1x9xf32>
    %c0_208 = arith.constant 0 : index
    %366 = memref.load %arg4[%c0_208] : memref<24xf32, #tpu.memory_space<smem>>
    %c1_209 = arith.constant 1 : index
    %c0_210 = arith.constant 0 : index
    %367 = vector.load %arg8[%c1_209, %c0_210] : memref<10x11xf32, #tpu.memory_space<vmem>>, vector<1x9xf32>
    %368 = vector.broadcast %366 : f32 to vector<1x9xf32>
    %369 = arith.mulf %367, %368 : vector<1x9xf32>
    %370 = arith.addf %365, %369 : vector<1x9xf32>
    %c1_211 = arith.constant 1 : index
    %371 = memref.load %arg4[%c1_211] : memref<24xf32, #tpu.memory_space<smem>>
    %c2_212 = arith.constant 2 : index
    %c0_213 = arith.constant 0 : index
    %372 = vector.load %arg8[%c2_212, %c0_213] : memref<10x11xf32, #tpu.memory_space<vmem>>, vector<1x9xf32>
    %373 = vector.broadcast %371 : f32 to vector<1x9xf32>
    %374 = arith.mulf %372, %373 : vector<1x9xf32>
    %375 = arith.addf %370, %374 : vector<1x9xf32>
    %c2_214 = arith.constant 2 : index
    %376 = memref.load %arg4[%c2_214] : memref<24xf32, #tpu.memory_space<smem>>
    %c3_215 = arith.constant 3 : index
    %c0_216 = arith.constant 0 : index
    %377 = vector.load %arg8[%c3_215, %c0_216] : memref<10x11xf32, #tpu.memory_space<vmem>>, vector<1x9xf32>
    %378 = vector.broadcast %376 : f32 to vector<1x9xf32>
    %379 = arith.mulf %377, %378 : vector<1x9xf32>
    %380 = arith.addf %375, %379 : vector<1x9xf32>
    %c3_217 = arith.constant 3 : index
    %381 = memref.load %arg4[%c3_217] : memref<24xf32, #tpu.memory_space<smem>>
    %c4_218 = arith.constant 4 : index
    %c0_219 = arith.constant 0 : index
    %382 = vector.load %arg8[%c4_218, %c0_219] : memref<10x11xf32, #tpu.memory_space<vmem>>, vector<1x9xf32>
    %383 = vector.broadcast %381 : f32 to vector<1x9xf32>
    %384 = arith.mulf %382, %383 : vector<1x9xf32>
    %385 = arith.addf %380, %384 : vector<1x9xf32>
    %c4_220 = arith.constant 4 : index
    %386 = memref.load %arg4[%c4_220] : memref<24xf32, #tpu.memory_space<smem>>
    %c1_221 = arith.constant 1 : index
    %c1_222 = arith.constant 1 : index
    %387 = vector.load %arg8[%c1_221, %c1_222] : memref<10x11xf32, #tpu.memory_space<vmem>>, vector<1x9xf32>
    %388 = vector.broadcast %386 : f32 to vector<1x9xf32>
    %389 = arith.mulf %387, %388 : vector<1x9xf32>
    %390 = arith.addf %385, %389 : vector<1x9xf32>
    %c5_223 = arith.constant 5 : index
    %391 = memref.load %arg4[%c5_223] : memref<24xf32, #tpu.memory_space<smem>>
    %c2_224 = arith.constant 2 : index
    %c1_225 = arith.constant 1 : index
    %392 = vector.load %arg8[%c2_224, %c1_225] : memref<10x11xf32, #tpu.memory_space<vmem>>, vector<1x9xf32>
    %393 = vector.broadcast %391 : f32 to vector<1x9xf32>
    %394 = arith.mulf %392, %393 : vector<1x9xf32>
    %395 = arith.addf %390, %394 : vector<1x9xf32>
    %c6_226 = arith.constant 6 : index
    %396 = memref.load %arg4[%c6_226] : memref<24xf32, #tpu.memory_space<smem>>
    %c3_227 = arith.constant 3 : index
    %c1_228 = arith.constant 1 : index
    %397 = vector.load %arg8[%c3_227, %c1_228] : memref<10x11xf32, #tpu.memory_space<vmem>>, vector<1x9xf32>
    %398 = vector.broadcast %396 : f32 to vector<1x9xf32>
    %399 = arith.mulf %397, %398 : vector<1x9xf32>
    %400 = arith.addf %395, %399 : vector<1x9xf32>
    %c7_229 = arith.constant 7 : index
    %401 = memref.load %arg4[%c7_229] : memref<24xf32, #tpu.memory_space<smem>>
    %c4_230 = arith.constant 4 : index
    %c1_231 = arith.constant 1 : index
    %402 = vector.load %arg8[%c4_230, %c1_231] : memref<10x11xf32, #tpu.memory_space<vmem>>, vector<1x9xf32>
    %403 = vector.broadcast %401 : f32 to vector<1x9xf32>
    %404 = arith.mulf %402, %403 : vector<1x9xf32>
    %405 = arith.addf %400, %404 : vector<1x9xf32>
    %c8_232 = arith.constant 8 : index
    %406 = memref.load %arg4[%c8_232] : memref<24xf32, #tpu.memory_space<smem>>
    %c1_233 = arith.constant 1 : index
    %c2_234 = arith.constant 2 : index
    %407 = vector.load %arg8[%c1_233, %c2_234] : memref<10x11xf32, #tpu.memory_space<vmem>>, vector<1x9xf32>
    %408 = vector.broadcast %406 : f32 to vector<1x9xf32>
    %409 = arith.mulf %407, %408 : vector<1x9xf32>
    %410 = arith.addf %405, %409 : vector<1x9xf32>
    %c9_235 = arith.constant 9 : index
    %411 = memref.load %arg4[%c9_235] : memref<24xf32, #tpu.memory_space<smem>>
    %c2_236 = arith.constant 2 : index
    %c2_237 = arith.constant 2 : index
    %412 = vector.load %arg8[%c2_236, %c2_237] : memref<10x11xf32, #tpu.memory_space<vmem>>, vector<1x9xf32>
    %413 = vector.broadcast %411 : f32 to vector<1x9xf32>
    %414 = arith.mulf %412, %413 : vector<1x9xf32>
    %415 = arith.addf %410, %414 : vector<1x9xf32>
    %c10_238 = arith.constant 10 : index
    %416 = memref.load %arg4[%c10_238] : memref<24xf32, #tpu.memory_space<smem>>
    %c3_239 = arith.constant 3 : index
    %c2_240 = arith.constant 2 : index
    %417 = vector.load %arg8[%c3_239, %c2_240] : memref<10x11xf32, #tpu.memory_space<vmem>>, vector<1x9xf32>
    %418 = vector.broadcast %416 : f32 to vector<1x9xf32>
    %419 = arith.mulf %417, %418 : vector<1x9xf32>
    %420 = arith.addf %415, %419 : vector<1x9xf32>
    %c11_241 = arith.constant 11 : index
    %421 = memref.load %arg4[%c11_241] : memref<24xf32, #tpu.memory_space<smem>>
    %c4_242 = arith.constant 4 : index
    %c2_243 = arith.constant 2 : index
    %422 = vector.load %arg8[%c4_242, %c2_243] : memref<10x11xf32, #tpu.memory_space<vmem>>, vector<1x9xf32>
    %423 = vector.broadcast %421 : f32 to vector<1x9xf32>
    %424 = arith.mulf %422, %423 : vector<1x9xf32>
    %425 = arith.addf %420, %424 : vector<1x9xf32>
    %c12_244 = arith.constant 12 : index
    %426 = memref.load %arg4[%c12_244] : memref<24xf32, #tpu.memory_space<smem>>
    %c6_245 = arith.constant 6 : index
    %c0_246 = arith.constant 0 : index
    %427 = vector.load %arg8[%c6_245, %c0_246] : memref<10x11xf32, #tpu.memory_space<vmem>>, vector<1x9xf32>
    %428 = vector.broadcast %426 : f32 to vector<1x9xf32>
    %429 = arith.mulf %427, %428 : vector<1x9xf32>
    %430 = arith.addf %425, %429 : vector<1x9xf32>
    %c13_247 = arith.constant 13 : index
    %431 = memref.load %arg4[%c13_247] : memref<24xf32, #tpu.memory_space<smem>>
    %c7_248 = arith.constant 7 : index
    %c0_249 = arith.constant 0 : index
    %432 = vector.load %arg8[%c7_248, %c0_249] : memref<10x11xf32, #tpu.memory_space<vmem>>, vector<1x9xf32>
    %433 = vector.broadcast %431 : f32 to vector<1x9xf32>
    %434 = arith.mulf %432, %433 : vector<1x9xf32>
    %435 = arith.addf %430, %434 : vector<1x9xf32>
    %c14_250 = arith.constant 14 : index
    %436 = memref.load %arg4[%c14_250] : memref<24xf32, #tpu.memory_space<smem>>
    %c8_251 = arith.constant 8 : index
    %c0_252 = arith.constant 0 : index
    %437 = vector.load %arg8[%c8_251, %c0_252] : memref<10x11xf32, #tpu.memory_space<vmem>>, vector<1x9xf32>
    %438 = vector.broadcast %436 : f32 to vector<1x9xf32>
    %439 = arith.mulf %437, %438 : vector<1x9xf32>
    %440 = arith.addf %435, %439 : vector<1x9xf32>
    %c15_253 = arith.constant 15 : index
    %441 = memref.load %arg4[%c15_253] : memref<24xf32, #tpu.memory_space<smem>>
    %c9_254 = arith.constant 9 : index
    %c0_255 = arith.constant 0 : index
    %442 = vector.load %arg8[%c9_254, %c0_255] : memref<10x11xf32, #tpu.memory_space<vmem>>, vector<1x9xf32>
    %443 = vector.broadcast %441 : f32 to vector<1x9xf32>
    %444 = arith.mulf %442, %443 : vector<1x9xf32>
    %445 = arith.addf %440, %444 : vector<1x9xf32>
    %c16_256 = arith.constant 16 : index
    %446 = memref.load %arg4[%c16_256] : memref<24xf32, #tpu.memory_space<smem>>
    %c6_257 = arith.constant 6 : index
    %c1_258 = arith.constant 1 : index
    %447 = vector.load %arg8[%c6_257, %c1_258] : memref<10x11xf32, #tpu.memory_space<vmem>>, vector<1x9xf32>
    %448 = vector.broadcast %446 : f32 to vector<1x9xf32>
    %449 = arith.mulf %447, %448 : vector<1x9xf32>
    %450 = arith.addf %445, %449 : vector<1x9xf32>
    %c17_259 = arith.constant 17 : index
    %451 = memref.load %arg4[%c17_259] : memref<24xf32, #tpu.memory_space<smem>>
    %c7_260 = arith.constant 7 : index
    %c1_261 = arith.constant 1 : index
    %452 = vector.load %arg8[%c7_260, %c1_261] : memref<10x11xf32, #tpu.memory_space<vmem>>, vector<1x9xf32>
    %453 = vector.broadcast %451 : f32 to vector<1x9xf32>
    %454 = arith.mulf %452, %453 : vector<1x9xf32>
    %455 = arith.addf %450, %454 : vector<1x9xf32>
    %c18_262 = arith.constant 18 : index
    %456 = memref.load %arg4[%c18_262] : memref<24xf32, #tpu.memory_space<smem>>
    %c8_263 = arith.constant 8 : index
    %c1_264 = arith.constant 1 : index
    %457 = vector.load %arg8[%c8_263, %c1_264] : memref<10x11xf32, #tpu.memory_space<vmem>>, vector<1x9xf32>
    %458 = vector.broadcast %456 : f32 to vector<1x9xf32>
    %459 = arith.mulf %457, %458 : vector<1x9xf32>
    %460 = arith.addf %455, %459 : vector<1x9xf32>
    %c19_265 = arith.constant 19 : index
    %461 = memref.load %arg4[%c19_265] : memref<24xf32, #tpu.memory_space<smem>>
    %c9_266 = arith.constant 9 : index
    %c1_267 = arith.constant 1 : index
    %462 = vector.load %arg8[%c9_266, %c1_267] : memref<10x11xf32, #tpu.memory_space<vmem>>, vector<1x9xf32>
    %463 = vector.broadcast %461 : f32 to vector<1x9xf32>
    %464 = arith.mulf %462, %463 : vector<1x9xf32>
    %465 = arith.addf %460, %464 : vector<1x9xf32>
    %c20_268 = arith.constant 20 : index
    %466 = memref.load %arg4[%c20_268] : memref<24xf32, #tpu.memory_space<smem>>
    %c6_269 = arith.constant 6 : index
    %c2_270 = arith.constant 2 : index
    %467 = vector.load %arg8[%c6_269, %c2_270] : memref<10x11xf32, #tpu.memory_space<vmem>>, vector<1x9xf32>
    %468 = vector.broadcast %466 : f32 to vector<1x9xf32>
    %469 = arith.mulf %467, %468 : vector<1x9xf32>
    %470 = arith.addf %465, %469 : vector<1x9xf32>
    %c21_271 = arith.constant 21 : index
    %471 = memref.load %arg4[%c21_271] : memref<24xf32, #tpu.memory_space<smem>>
    %c7_272 = arith.constant 7 : index
    %c2_273 = arith.constant 2 : index
    %472 = vector.load %arg8[%c7_272, %c2_273] : memref<10x11xf32, #tpu.memory_space<vmem>>, vector<1x9xf32>
    %473 = vector.broadcast %471 : f32 to vector<1x9xf32>
    %474 = arith.mulf %472, %473 : vector<1x9xf32>
    %475 = arith.addf %470, %474 : vector<1x9xf32>
    %c22_274 = arith.constant 22 : index
    %476 = memref.load %arg4[%c22_274] : memref<24xf32, #tpu.memory_space<smem>>
    %c8_275 = arith.constant 8 : index
    %c2_276 = arith.constant 2 : index
    %477 = vector.load %arg8[%c8_275, %c2_276] : memref<10x11xf32, #tpu.memory_space<vmem>>, vector<1x9xf32>
    %478 = vector.broadcast %476 : f32 to vector<1x9xf32>
    %479 = arith.mulf %477, %478 : vector<1x9xf32>
    %480 = arith.addf %475, %479 : vector<1x9xf32>
    %c23_277 = arith.constant 23 : index
    %481 = memref.load %arg4[%c23_277] : memref<24xf32, #tpu.memory_space<smem>>
    %c9_278 = arith.constant 9 : index
    %c2_279 = arith.constant 2 : index
    %482 = vector.load %arg8[%c9_278, %c2_279] : memref<10x11xf32, #tpu.memory_space<vmem>>, vector<1x9xf32>
    %483 = vector.broadcast %481 : f32 to vector<1x9xf32>
    %484 = arith.mulf %482, %483 : vector<1x9xf32>
    %485 = arith.addf %480, %484 : vector<1x9xf32>
    %cst_280 = arith.constant 0.000000e+00 : f32
    %486 = vector.broadcast %cst_280 : f32 to vector<1x9xf32>
    %487 = arith.maximumf %485, %486 : vector<1x9xf32>
    %c0_281 = arith.constant 0 : index
    %c1_282 = arith.constant 1 : index
    %c0_283 = arith.constant 0 : index
    %488 = vector.load %arg6[%c0_281, %c1_282, %c0_283] : memref<1x2x9xf32, #tpu.memory_space<vmem>>, vector<1x1x9xf32>
    %489 = vector.shape_cast %488 : vector<1x1x9xf32> to vector<1x9xf32>
    %490 = vector.shape_cast %487 : vector<1x9xf32> to vector<1x1x9xf32>
    tpu.vector_store %arg6[%c0_281, %c1_282, %c0_283], %490 {strides = array<i32>} : memref<1x2x9xf32, #tpu.memory_space<vmem>>, vector<1x1x9xf32>,
    return
  }
  func.func @transform_0(%arg0: i32) -> (i32, i32, i32) {
    %c0_i32 = arith.constant 0 : i32
    %c0_i32_0 = arith.constant 0 : i32
    %c0_i32_1 = arith.constant 0 : i32
    return %arg0, %c0_i32, %c0_i32_0 : i32, i32, i32
  }
  func.func @transform_1(%arg0: i32) -> i32 {
    %c0_i32 = arith.constant 0 : i32
    %c0_i32_0 = arith.constant 0 : i32
    return %c0_i32 : i32
  }
  func.func @transform_2(%arg0: i32) -> i32 {
    %c0_i32 = arith.constant 0 : i32
    %c0_i32_0 = arith.constant 0 : i32
    return %c0_i32 : i32
  }
  func.func @transform_3(%arg0: i32) -> i32 {
    %c0_i32 = arith.constant 0 : i32
    %c0_i32_0 = arith.constant 0 : i32
    return %c0_i32 : i32
  }
  func.func @transform_4(%arg0: i32) -> i32 {
    %c0_i32 = arith.constant 0 : i32
    %c0_i32_0 = arith.constant 0 : i32
    return %c0_i32 : i32
  }
  func.func @transform_5(%arg0: i32) -> (i32, i32, i32) {
    %c0_i32 = arith.constant 0 : i32
    %c0_i32_0 = arith.constant 0 : i32
    %c0_i32_1 = arith.constant 0 : i32
    return %arg0, %c0_i32, %c0_i32_0 : i32, i32, i32
  }
}

</mosaic_0001>

<llo_original>
// kernel: tpu_custom_call.1
$region0: #{tpu_custom_call.1}
  #allocation0 [shape = 'u32[]', space=smem, size = 0x4, offset = 0x4, fixed_abs, tag = 'smem constant byte address 0x4 - core index']
  #allocation1 [shape = 'u32[144,128]{1,0:T(1,128)}', space=vmem, size = 0x12000, scoped, tag = 'internal scratch']
  #allocation2 [shape = 'f32[4,10]{1,0:T(4,128)}', space=vmem, size = 0x800, scoped, tag = 'scratch operand']
  #allocation3 [shape = 'f32[10,11]{1,0:T(8,128)}', space=vmem, size = 0x2000, scoped, tag = 'scratch operand']
  #allocation4 [shape = 'f32[1]{0:T(128)S(6)}', space=smem, size = 0x200, scoped, tag = 'scoped memory for tpu_custom_call.1']
  %s0 = inlined_call_operand.hbm [shape: f32[2,4,8], index: 0, kind: input, shape index: {}]
  %s1 = inlined_call_operand.vmem [shape: f32[16], index: 1, kind: input, shape index: {}]
  %s2 = inlined_call_operand.vmem [shape: f32[2], index: 2, kind: input, shape index: {}]
  %s3 = inlined_call_operand.vmem [shape: f32[24], index: 3, kind: input, shape index: {}]
  %s4 = inlined_call_operand.<no memory space> [shape: f32[1], index: 4, kind: input, shape index: {}]
  %s5 = inlined_call_operand.hbm [shape: f32[2,2,9], index: 5, kind: output, shape index: {}]
  %s6 = sld [smem:[#allocation0]]
  $region69: #{tpu_custom_call.1} parent=0
    _
  %s8 = ssub.s32 1, %s6
  %s9 = scalar_select 0, %s8, %s6
  %10 = sst [smem:[#allocation4]] %s4
  $region1: #{tpu_custom_call.1} parent=0
    #allocation5 [shape = 'u8[4096]{0}', space=vmem, size = 0x1000, scoped, tag = 'input window, operand 0']
    #allocation6 [shape = 's32[2]{0}', space=sflag, size = 0x8, scoped, tag = 'scoped memory for tpu_custom_call.1']
    #allocation7 [shape = 's32[2]{0}', space=sflag, size = 0x8, scoped, tag = 'scoped memory for tpu_custom_call.1']
    #allocation8 [shape = 's32[2]{0}', space=sflag, size = 0x8, scoped, tag = 'scoped memory for tpu_custom_call.1']
    #allocation9 [shape = 'u8[512]{0}', space=smem, size = 0x200, scoped, tag = 'input window, operand 1, single buffered']
    #allocation10 [shape = 'u8[512]{0}', space=smem, size = 0x200, scoped, tag = 'input window, operand 2, single buffered']
    #allocation11 [shape = 's32[1]{0}', space=sflag, size = 0x4, scoped, tag = 'scoped memory for tpu_custom_call.1']
    #allocation12 [shape = 'u8[512]{0}', space=smem, size = 0x200, scoped, tag = 'input window, operand 3, single buffered']
    #allocation13 [shape = 'u8[2048]{0}', space=vmem, size = 0x800, scoped, tag = 'output window, operand 0']
    %11 = vsyncpa [#allocation6], 0
    %s12 = scalar_lea.sflag [#allocation6], 1
    %13 = vsyncpa %s12, 0
    %14 = vsyncpa [#allocation8], 0
    %15 = vsyncpa [#allocation11], 0
    %16 = vsyncpa [#allocation7], 0
    %s17 = scalar_lea.sflag [#allocation7], 1
    %18 = vsyncpa %s17, 0
    loop: start=0, step=1, limit=4
    $region2: #{tpu_custom_call.1} parent=1 // loop_pre_header
      _
    $region3: #{tpu_custom_call.1} parent=1 // loop_header
      %s20 = sphi 0, %s24
      %p21 = scmp.ge.s32.totalorder %s20, 4
      %s30 = sphi 0, %s32
      %s33 = sphi 0, %s30
      %s34 = sphi 0, %s33
      %s50 = sphi 0, %s34
      %s54 = sphi 0, %s54
      %s56 = sphi 0, %s54
      %s57 = sphi 0, %s56
      %s71 = sphi 0, %s57
      %s75 = sphi 0, %s75
      %s77 = sphi 0, %s75
      %s78 = sphi 0, %s77
      %s92 = sphi 0, %s78
      %s96 = sphi 0, %s96
      %s98 = sphi 0, %s96
      %s99 = sphi 0, %s98
      %s113 = sphi 0, %s99
      %s117 = sphi 0, %s117
      %s119 = sphi 0, %s117
      %s120 = sphi 0, %s119
      %s134 = sphi 0, %s120
      %s140 = sphi 0, %s142
      %s143 = sphi 0, %s140
      %s144 = sphi 0, %s143
      %s160 = sphi 0, %s144
    $region4: #{tpu_custom_call.1} parent=1 // loop_header_branch
      %23 = sbr.rel (%p21) target = $region8
    $region5: #{tpu_custom_call.1} parent=1 // loop_body
      %s25 = ssub.s32 %s20, 1
      %s26 = ssub.s32 %s20, 2
      %s27 = sadd.s32 %s20, 1
      %s28 = ssub.s32 %s20, %s27
      %p29 = scmp.eq.s32.totalorder %s28, 0
      %s31 = sadd.s32 %s30, 1
      %s32 = scalar_select %p29, %s30, %s31
      %p35 = pneg %p29
      %p36 = scmp.eq.s32.totalorder %s20, 1
      %p37 = por %p35, %p36
      %p38 = scmp.ne.s32.totalorder %s30, %s33
      %p39 = scmp.eq.s32.totalorder %s20, 0
      %p40 = por %p38, %p39
      %p41 = scmp.ne.s32.totalorder %s30, %s33
      %p42 = scmp.eq.s32.totalorder %s25, 1
      %p43 = por %p41, %p42
      %p44 = scmp.ne.s32.totalorder %s33, %s34
      %p45 = scmp.eq.s32.totalorder %s25, 0
      %p46 = por %p44, %p45
      %p47 = scmp.ne.s32.totalorder %s33, %s34
      %p48 = scmp.eq.s32.totalorder %s26, 1
      %p49 = por %p47, %p48
      %p51 = scmp.ne.s32.totalorder %s34, %s50
      %p52 = scmp.eq.s32.totalorder %s26, 0
      %p53 = por %p51, %p52
      %s55 = sadd.s32 %s54, 1
      %p58 = scmp.eq.s32.totalorder %s20, 1
      %p59 = scmp.ne.s32.totalorder %s54, %s56
      %p60 = scmp.eq.s32.totalorder %s20, 0
      %p61 = por %p59, %p60
      %p62 = scmp.ne.s32.totalorder %s54, %s56
      %p63 = scmp.eq.s32.totalorder %s25, 1
      %p64 = por %p62, %p63
      %p65 = scmp.ne.s32.totalorder %s56, %s57
      %p66 = scmp.eq.s32.totalorder %s25, 0
      %p67 = por %p65, %p66
      %p68 = scmp.ne.s32.totalorder %s56, %s57
      %p69 = scmp.eq.s32.totalorder %s26, 1
      %p70 = por %p68, %p69
      %p72 = scmp.ne.s32.totalorder %s57, %s71
      %p73 = scmp.eq.s32.totalorder %s26, 0
      %p74 = por %p72, %p73
      %s76 = sadd.s32 %s75, 1
      %p79 = scmp.eq.s32.totalorder %s20, 1
      %p80 = scmp.ne.s32.totalorder %s75, %s77
      %p81 = scmp.eq.s32.totalorder %s20, 0
      %p82 = por %p80, %p81
      %p83 = scmp.ne.s32.totalorder %s75, %s77
      %p84 = scmp.eq.s32.totalorder %s25, 1
      %p85 = por %p83, %p84
      %p86 = scmp.ne.s32.totalorder %s77, %s78
      %p87 = scmp.eq.s32.totalorder %s25, 0
      %p88 = por %p86, %p87
      %p89 = scmp.ne.s32.totalorder %s77, %s78
      %p90 = scmp.eq.s32.totalorder %s26, 1
      %p91 = por %p89, %p90
      %p93 = scmp.ne.s32.totalorder %s78, %s92
      %p94 = scmp.eq.s32.totalorder %s26, 0
      %p95 = por %p93, %p94
      %s97 = sadd.s32 %s96, 1
      %p100 = scmp.eq.s32.totalorder %s20, 1
      %p101 = scmp.ne.s32.totalorder %s96, %s98
      %p102 = scmp.eq.s32.totalorder %s20, 0
      %p103 = por %p101, %p102
      %p104 = scmp.ne.s32.totalorder %s96, %s98
      %p105 = scmp.eq.s32.totalorder %s25, 1
      %p106 = por %p104, %p105
      %p107 = scmp.ne.s32.totalorder %s98, %s99
      %p108 = scmp.eq.s32.totalorder %s25, 0
      %p109 = por %p107, %p108
      %p110 = scmp.ne.s32.totalorder %s98, %s99
      %p111 = scmp.eq.s32.totalorder %s26, 1
      %p112 = por %p110, %p111
      %p114 = scmp.ne.s32.totalorder %s99, %s113
      %p115 = scmp.eq.s32.totalorder %s26, 0
      %p116 = por %p114, %p115
      %s118 = sadd.s32 %s117, 1
      %p121 = scmp.eq.s32.totalorder %s20, 1
      %p122 = scmp.ne.s32.totalorder %s117, %s119
      %p123 = scmp.eq.s32.totalorder %s20, 0
      %p124 = por %p122, %p123
      %p125 = scmp.ne.s32.totalorder %s117, %s119
      %p126 = scmp.eq.s32.totalorder %s25, 1
      %p127 = por %p125, %p126
      %p128 = scmp.ne.s32.totalorder %s119, %s120
      %p129 = scmp.eq.s32.totalorder %s25, 0
      %p130 = por %p128, %p129
      %p131 = scmp.ne.s32.totalorder %s119, %s120
      %p132 = scmp.eq.s32.totalorder %s26, 1
      %p133 = por %p131, %p132
      %p135 = scmp.ne.s32.totalorder %s120, %s134
      %p136 = scmp.eq.s32.totalorder %s26, 0
      %p137 = por %p135, %p136
      %s138 = ssub.s32 %s20, %s27
      %p139 = scmp.eq.s32.totalorder %s138, 0
      %s141 = sadd.s32 %s140, 1
      %s142 = scalar_select %p139, %s140, %s141
      %p145 = pneg %p139
      %p146 = scmp.eq.s32.totalorder %s20, 1
      %p147 = por %p145, %p146
      %p148 = scmp.ne.s32.totalorder %s140, %s143
      %p149 = scmp.eq.s32.totalorder %s20, 0
      %p150 = por %p148, %p149
      %p151 = scmp.ne.s32.totalorder %s140, %s143
      %p152 = scmp.eq.s32.totalorder %s25, 1
      %p153 = por %p151, %p152
      %p154 = scmp.ne.s32.totalorder %s143, %s144
      %p155 = scmp.eq.s32.totalorder %s25, 0
      %p156 = por %p154, %p155
      %p157 = scmp.ne.s32.totalorder %s143, %s144
      %p158 = scmp.eq.s32.totalorder %s26, 1
      %p159 = por %p157, %p158
      %p161 = scmp.ne.s32.totalorder %s144, %s160
      %p162 = scmp.eq.s32.totalorder %s26, 0
      %p163 = por %p161, %p162
      %p164 = scmp.le.s32.totalorder 1, %s20
      %p165 = scmp.lt.s32.totalorder %s20, 3
      %p166 = pnand %p164, %p165
      %p167 = pneg %p166
      // Predicated region
      $region9: #{tpu_custom_call.1} parent=5 // pred_check
        _
      $region10: #{tpu_custom_call.1} parent=5 // pred_check_branch
        %169 = sbr.rel (%p166) target = $region12
      $region11: #{tpu_custom_call.1} parent=5 // pred_region
        %s170 = ssub.s32 %s20, 1
        // Predicated region
        $region13: #{tpu_custom_call.1} parent=11 // pred_check
          %p171 = pneg %p67
        $region14: #{tpu_custom_call.1} parent=11 // pred_check_branch
          %173 = sbr.rel (%p171) target = $region16
        $region15: #{tpu_custom_call.1} parent=11 // pred_region
          %s175 = ssub.s32 16, 16
          %176 = vsyncadd [#allocation8], %s175
          %s178 = sshll.u32 %s1, 4
          %s179 = int_to_ptr.vmem [resolvable:$true] %s178
          %181 = dma.vmem_to_smem %s179, 16, [#allocation9], [#allocation8]
        $region16: #{tpu_custom_call.1} parent=11 // pred_fallthru
          _
        // Predicated region
        $region17: #{tpu_custom_call.1} parent=11 // pred_check
          %p182 = pneg %p88
        $region18: #{tpu_custom_call.1} parent=11 // pred_check_branch
          %184 = sbr.rel (%p182) target = $region20
        $region19: #{tpu_custom_call.1} parent=11 // pred_region
          %s186 = ssub.s32 16, 16
          %187 = vsyncadd [#allocation11], %s186
          %s189 = sshll.u32 %s2, 4
          %s190 = int_to_ptr.vmem [resolvable:$true] %s189
          %192 = dma.vmem_to_smem %s190, 16, [#allocation10], [#allocation11]
        $region20: #{tpu_custom_call.1} parent=11 // pred_fallthru
          _
        // Predicated region
        $region21: #{tpu_custom_call.1} parent=11 // pred_check
          %p193 = pneg %p109
        $region22: #{tpu_custom_call.1} parent=11 // pred_check_branch
          %195 = sbr.rel (%p193) target = $region24
        $region23: #{tpu_custom_call.1} parent=11 // pred_region
          %s197 = ssub.s32 16, 16
          %198 = vsyncadd [#allocation11], %s197
          %s200 = sshll.u32 %s3, 4
          %s201 = int_to_ptr.vmem [resolvable:$true] %s200
          %203 = dma.vmem_to_smem %s201, 16, [#allocation12], [#allocation11]
        $region24: #{tpu_custom_call.1} parent=11 // pred_fallthru
          _
        // Predicated region
        $region25: #{tpu_custom_call.1} parent=11 // pred_check
          %p204 = pneg %p130
        $region26: #{tpu_custom_call.1} parent=11 // pred_check_branch
          %206 = sbr.rel (%p204) target = $region28
        $region27: #{tpu_custom_call.1} parent=11 // pred_region
          _
        $region28: #{tpu_custom_call.1} parent=11 // pred_fallthru
          _
      $region12: #{tpu_custom_call.1} parent=5 // pred_fallthru
        _
      %p207 = scmp.lt.s32.totalorder %s20, 2
      // Predicated region
      $region29: #{tpu_custom_call.1} parent=5 // pred_check
        %p208 = pneg %p207
      $region30: #{tpu_custom_call.1} parent=5 // pred_check_branch
        %210 = sbr.rel (%p208) target = $region32
      $region31: #{tpu_custom_call.1} parent=5 // pred_region
        // Predicated region
        $region33: #{tpu_custom_call.1} parent=31 // pred_check
          %p211 = pneg %p40
        $region34: #{tpu_custom_call.1} parent=31 // pred_check_branch
          %213 = sbr.rel (%p211) target = $region36
        $region35: #{tpu_custom_call.1} parent=31 // pred_region
          %s214 = sand.u32 %s30, 1
          %s215 = scalar_lea.sflag [#allocation6], %s214
          %s216 = sand.u32 %s30, 1
          %s217 = smul.addr %s216, 4
          %s218 = scalar_lea.vmem [#allocation5], %s217
          %s220 = ssub.s32 64, 64
          %221 = vsyncadd %s215, %s220
          %s222 = smul.addr %s20, 64
          %s223 = scalar_lea.hbm %s0, %s222
          %s225 = sshll.u32 %s218, 4
          %s226 = int_to_ptr.vmem [resolvable:$true] %s225
          %228 = dma.hbm_to_vmem [thread:$0]  %s223, 64, %s226, %s215
        $region36: #{tpu_custom_call.1} parent=31 // pred_fallthru
          _
      $region32: #{tpu_custom_call.1} parent=5 // pred_fallthru
        _
      %p229 = scmp.le.s32.totalorder 1, %s20
      %p230 = scmp.lt.s32.totalorder %s20, 3
      %p231 = pnand %p229, %p230
      %p232 = pneg %p231
      // Predicated region
      $region37: #{tpu_custom_call.1} parent=5 // pred_check
        _
      $region38: #{tpu_custom_call.1} parent=5 // pred_check_branch
        %234 = sbr.rel (%p231) target = $region40
      $region39: #{tpu_custom_call.1} parent=5 // pred_region
        %s235 = ssub.s32 %s20, 1
        %s236 = sand.u32 %s33, 1
        %s237 = scalar_lea.sflag [#allocation6], %s236
        %s238 = sand.u32 %s33, 1
        %s239 = smul.addr %s238, 4
        %s240 = scalar_lea.vmem [#allocation5], %s239
        // Predicated region
        $region41: #{tpu_custom_call.1} parent=39 // pred_check
          %p241 = pneg %p46
        $region42: #{tpu_custom_call.1} parent=39 // pred_check_branch
          %243 = sbr.rel (%p241) target = $region44
        $region43: #{tpu_custom_call.1} parent=39 // pred_region
          %244 = dma.done %s237, 64
        $region44: #{tpu_custom_call.1} parent=39 // pred_fallthru
          _
        // Predicated region
        $region45: #{tpu_custom_call.1} parent=39 // pred_check
          %p245 = pneg %p67
        $region46: #{tpu_custom_call.1} parent=39 // pred_check_branch
          %247 = sbr.rel (%p245) target = $region48
        $region47: #{tpu_custom_call.1} parent=39 // pred_region
          %248 = dma.done [#allocation8], 16
        $region48: #{tpu_custom_call.1} parent=39 // pred_fallthru
          _
        // Predicated region
        $region49: #{tpu_custom_call.1} parent=39 // pred_check
          %p249 = pneg %p88
        $region50: #{tpu_custom_call.1} parent=39 // pred_check_branch
          %251 = sbr.rel (%p249) target = $region52
        $region51: #{tpu_custom_call.1} parent=39 // pred_region
          %252 = dma.done [#allocation11], 16
        $region52: #{tpu_custom_call.1} parent=39 // pred_fallthru
          _
        // Predicated region
        $region53: #{tpu_custom_call.1} parent=39 // pred_check
          %p253 = pneg %p109
        $region54: #{tpu_custom_call.1} parent=39 // pred_check_branch
          %255 = sbr.rel (%p253) target = $region56
        $region55: #{tpu_custom_call.1} parent=39 // pred_region
          %256 = dma.done [#allocation11], 16
        $region56: #{tpu_custom_call.1} parent=39 // pred_fallthru
          _
        %257 = sfence
        %s258 = sand.u32 %s33, 1
        %s259 = scalar_lea.sflag [#allocation6], %s258
        %s260 = sand.u32 %s33, 1
        %s261 = smul.addr %s260, 4
        %s262 = scalar_lea.vmem [#allocation5], %s261
        %p263 = pneg %p46
        %p264 = pneg %p43
        %p265 = pneg %p67
        %p266 = pneg %p64
        %p267 = pneg %p88
        %p268 = pneg %p85
        %p269 = pneg %p109
        %p270 = pneg %p106
        %p271 = pneg %p130
        %p272 = pneg %p127
        %p273 = pneg %p156
        %p274 = pneg %p153
        %s275 = sand.u32 %s143, 1
        %s276 = scalar_lea.sflag [#allocation7], %s275
        %s277 = sand.u32 %s143, 1
        %s278 = smul.addr %s277, 2
        %s279 = scalar_lea.vmem [#allocation13], %s278
        %vm280 = vcmask 76800
        %281 = vst.msk [vmem:[#allocation2] sm:$0xf] %vm280, 0.0
        %v282 = vld [vmem:[%s240] sm:$0xf]
        %284 = vrot.lane.b32.xlu0 %v282, 1
        %v285 = vpop.permute.xlu0 %284
        %vm287 = vcmask 68616
        %288 = vst.msk [vmem:[#allocation2] sm:$0xf] %vm287, %v285
        %vm289 = vcmask 89088
        %290 = vst.msk [vmem:[#allocation3] sm:$0xff] %vm289, 0.0
        %vm291 = vcmask 82944
        %292 = vst.msk [vmem:[#allocation3 + $0x8] sm:$0x3] %vm291, 0.0
        %s293 = sld [smem:[#allocation10]]
        %v294 = vstv %s293
        %s295 = sld [smem:[#allocation9 + $0x1]]
        %v296 = vld [vmem:[#allocation2] sm:$0x1]
        %v297 = vstv %s295
        %v298 = vmul.f32 %v296, %v297
        %v299 = vadd.f32 %v294, %v298
        %s300 = sld [smem:[#allocation9 + $0x2]]
        %v301 = vld [vmem:[#allocation2 + $0x1] sm:$0x1]
        %v302 = vstv %s300
        %v303 = vmul.f32 %v301, %v302
        %v304 = vadd.f32 %v299, %v303
        %s305 = sld [smem:[#allocation9 + $0x3]]
        %v306 = vld [vmem:[#allocation2 + $0x2] sm:$0x1]
        %v307 = vstv %s305
        %v308 = vmul.f32 %v306, %v307
        %v309 = vadd.f32 %v304, %v308
        %s310 = sld [smem:[#allocation9 + $0x5]]
        %v311 = vstv %s310
        %v312 = vmul.f32 %v296, %v311
        %314 = vrot.lane.b32.xlu0 %v312, 127
        %v315 = vpop.permute.xlu0 %314
        %v317 = vadd.f32 %v309, %v315
        %s318 = sld [smem:[#allocation9 + $0x6]]
        %v319 = vstv %s318
        %v320 = vmul.f32 %v301, %v319
        %322 = vrot.lane.b32.xlu0 %v320, 127
        %v323 = vpop.permute.xlu0 %322
        %v325 = vadd.f32 %v317, %v323
        %s326 = sld [smem:[#allocation9 + $0x7]]
        %v327 = vstv %s326
        %v328 = vmul.f32 %v306, %v327
        %330 = vrot.lane.b32.xlu0 %v328, 127
        %v331 = vpop.permute.xlu0 %330
        %v333 = vadd.f32 %v325, %v331
        %v334 = vmax.f32 %v333, 0.0
        %336 = vrot.lane.b32.xlu0 %v334, 1
        %v337 = vpop.permute.xlu0 %336
        %vm339 = vcmask 73736
        %340 = vst.msk [vmem:[#allocation3 + $0x1] sm:$0x1] %vm339, %v337
        %s341 = sld [smem:[#allocation10]]
        %v342 = vstv %s341
        %s343 = sld [smem:[#allocation9]]
        %v344 = vld [vmem:[#allocation2] sm:$0x1]
        %v345 = vstv %s343
        %v346 = vmul.f32 %v344, %v345
        %v347 = vadd.f32 %v342, %v346
        %s348 = sld [smem:[#allocation9 + $0x1]]
        %v349 = vld [vmem:[#allocation2 + $0x1] sm:$0x1]
        %v350 = vstv %s348
        %v351 = vmul.f32 %v349, %v350
        %v352 = vadd.f32 %v347, %v351
        %s353 = sld [smem:[#allocation9 + $0x2]]
        %v354 = vld [vmem:[#allocation2 + $0x2] sm:$0x1]
        %v355 = vstv %s353
        %v356 = vmul.f32 %v354, %v355
        %v357 = vadd.f32 %v352, %v356
        %s358 = sld [smem:[#allocation9 + $0x3]]
        %v359 = vld [vmem:[#allocation2 + $0x3] sm:$0x1]
        %v360 = vstv %s358
        %v361 = vmul.f32 %v359, %v360
        %v362 = vadd.f32 %v357, %v361
        %s363 = sld [smem:[#allocation9 + $0x4]]
        %v364 = vstv %s363
        %v365 = vmul.f32 %v344, %v364
        %367 = vrot.lane.b32.xlu0 %v365, 127
        %v368 = vpop.permute.xlu0 %367
        %v370 = vadd.f32 %v362, %v368
        %s371 = sld [smem:[#allocation9 + $0x5]]
        %v372 = vstv %s371
        %v373 = vmul.f32 %v349, %v372
        %375 = vrot.lane.b32.xlu0 %v373, 127
        %v376 = vpop.permute.xlu0 %375
        %v378 = vadd.f32 %v370, %v376
        %s379 = sld [smem:[#allocation9 + $0x6]]
        %v380 = vstv %s379
        %v381 = vmul.f32 %v354, %v380
        %383 = vrot.lane.b32.xlu0 %v381, 127
        %v384 = vpop.permute.xlu0 %383
        %v386 = vadd.f32 %v378, %v384
        %s387 = sld [smem:[#allocation9 + $0x7]]
        %v388 = vstv %s387
        %v389 = vmul.f32 %v359, %v388
        %391 = vrot.lane.b32.xlu0 %v389, 127
        %v392 = vpop.permute.xlu0 %391
        %v394 = vadd.f32 %v386, %v392
        %v395 = vmax.f32 %v394, 0.0
        %397 = vrot.lane.b32.xlu0 %v395, 1
        %v398 = vpop.permute.xlu0 %397
        %400 = vst.msk [vmem:[#allocation3 + $0x2] sm:$0x1] %vm339, %v398
        %s401 = sld [smem:[#allocation10]]
        %v402 = vstv %s401
        %s403 = sld [smem:[#allocation9]]
        %v404 = vld [vmem:[#allocation2 + $0x1] sm:$0x1]
        %v405 = vstv %s403
        %v406 = vmul.f32 %v404, %v405
        %v407 = vadd.f32 %v402, %v406
        %s408 = sld [smem:[#allocation9 + $0x1]]
        %v409 = vld [vmem:[#allocation2 + $0x2] sm:$0x1]
        %v410 = vstv %s408
        %v411 = vmul.f32 %v409, %v410
        %v412 = vadd.f32 %v407, %v411
        %s413 = sld [smem:[#allocation9 + $0x2]]
        %v414 = vld [vmem:[#allocation2 + $0x3] sm:$0x1]
        %v415 = vstv %s413
        %v416 = vmul.f32 %v414, %v415
        %v417 = vadd.f32 %v412, %v416
        %s418 = sld [smem:[#allocation9 + $0x4]]
        %v419 = vstv %s418
        %v420 = vmul.f32 %v404, %v419
        %422 = vrot.lane.b32.xlu0 %v420, 127
        %v423 = vpop.permute.xlu0 %422
        %v425 = vadd.f32 %v417, %v423
        %s426 = sld [smem:[#allocation9 + $0x5]]
        %v427 = vstv %s426
        %v428 = vmul.f32 %v409, %v427
        %430 = vrot.lane.b32.xlu0 %v428, 127
        %v431 = vpop.permute.xlu0 %430
        %v433 = vadd.f32 %v425, %v431
        %s434 = sld [smem:[#allocation9 + $0x6]]
        %v435 = vstv %s434
        %v436 = vmul.f32 %v414, %v435
        %438 = vrot.lane.b32.xlu0 %v436, 127
        %v439 = vpop.permute.xlu0 %438
        %v441 = vadd.f32 %v433, %v439
        %v442 = vmax.f32 %v441, 0.0
        %444 = vrot.lane.b32.xlu0 %v442, 1
        %v445 = vpop.permute.xlu0 %444
        %447 = vst.msk [vmem:[#allocation3 + $0x3] sm:$0x1] %vm339, %v445
        %s448 = sld [smem:[#allocation10 + $0x1]]
        %v449 = vstv %s448
        %s450 = sld [smem:[#allocation9 + $0x9]]
        %v451 = vld [vmem:[#allocation2] sm:$0x1]
        %v452 = vstv %s450
        %v453 = vmul.f32 %v451, %v452
        %v454 = vadd.f32 %v449, %v453
        %s455 = sld [smem:[#allocation9 + $0xa]]
        %v456 = vld [vmem:[#allocation2 + $0x1] sm:$0x1]
        %v457 = vstv %s455
        %v458 = vmul.f32 %v456, %v457
        %v459 = vadd.f32 %v454, %v458
        %s460 = sld [smem:[#allocation9 + $0xb]]
        %v461 = vld [vmem:[#allocation2 + $0x2] sm:$0x1]
        %v462 = vstv %s460
        %v463 = vmul.f32 %v461, %v462
        %v464 = vadd.f32 %v459, %v463
        %s465 = sld [smem:[#allocation9 + $0xd]]
        %v466 = vstv %s465
        %v467 = vmul.f32 %v451, %v466
        %469 = vrot.lane.b32.xlu0 %v467, 127
        %v470 = vpop.permute.xlu0 %469
        %v472 = vadd.f32 %v464, %v470
        %s473 = sld [smem:[#allocation9 + $0xe]]
        %v474 = vstv %s473
        %v475 = vmul.f32 %v456, %v474
        %477 = vrot.lane.b32.xlu0 %v475, 127
        %v478 = vpop.permute.xlu0 %477
        %v480 = vadd.f32 %v472, %v478
        %s481 = sld [smem:[#allocation9 + $0xf]]
        %v482 = vstv %s481
        %v483 = vmul.f32 %v461, %v482
        %485 = vrot.lane.b32.xlu0 %v483, 127
        %v486 = vpop.permute.xlu0 %485
        %v488 = vadd.f32 %v480, %v486
        %v489 = vmax.f32 %v488, 0.0
        %491 = vrot.lane.b32.xlu0 %v489, 1
        %v492 = vpop.permute.xlu0 %491
        %494 = vst.msk [vmem:[#allocation3 + $0x6] sm:$0x1] %vm339, %v492
        %s495 = sld [smem:[#allocation10 + $0x1]]
        %v496 = vstv %s495
        %s497 = sld [smem:[#allocation9 + $0x8]]
        %v498 = vld [vmem:[#allocation2] sm:$0x1]
        %v499 = vstv %s497
        %v500 = vmul.f32 %v498, %v499
        %v501 = vadd.f32 %v496, %v500
        %s502 = sld [smem:[#allocation9 + $0x9]]
        %v503 = vld [vmem:[#allocation2 + $0x1] sm:$0x1]
        %v504 = vstv %s502
        %v505 = vmul.f32 %v503, %v504
        %v506 = vadd.f32 %v501, %v505
        %s507 = sld [smem:[#allocation9 + $0xa]]
        %v508 = vld [vmem:[#allocation2 + $0x2] sm:$0x1]
        %v509 = vstv %s507
        %v510 = vmul.f32 %v508, %v509
        %v511 = vadd.f32 %v506, %v510
        %s512 = sld [smem:[#allocation9 + $0xb]]
        %v513 = vld [vmem:[#allocation2 + $0x3] sm:$0x1]
        %v514 = vstv %s512
        %v515 = vmul.f32 %v513, %v514
        %v516 = vadd.f32 %v511, %v515
        %s517 = sld [smem:[#allocation9 + $0xc]]
        %v518 = vstv %s517
        %v519 = vmul.f32 %v498, %v518
        %521 = vrot.lane.b32.xlu0 %v519, 127
        %v522 = vpop.permute.xlu0 %521
        %v524 = vadd.f32 %v516, %v522
        %s525 = sld [smem:[#allocation9 + $0xd]]
        %v526 = vstv %s525
        %v527 = vmul.f32 %v503, %v526
        %529 = vrot.lane.b32.xlu0 %v527, 127
        %v530 = vpop.permute.xlu0 %529
        %v532 = vadd.f32 %v524, %v530
        %s533 = sld [smem:[#allocation9 + $0xe]]
        %v534 = vstv %s533
        %v535 = vmul.f32 %v508, %v534
        %537 = vrot.lane.b32.xlu0 %v535, 127
        %v538 = vpop.permute.xlu0 %537
        %v540 = vadd.f32 %v532, %v538
        %s541 = sld [smem:[#allocation9 + $0xf]]
        %v542 = vstv %s541
        %v543 = vmul.f32 %v513, %v542
        %545 = vrot.lane.b32.xlu0 %v543, 127
        %v546 = vpop.permute.xlu0 %545
        %v548 = vadd.f32 %v540, %v546
        %v549 = vmax.f32 %v548, 0.0
        %551 = vrot.lane.b32.xlu0 %v549, 1
        %v552 = vpop.permute.xlu0 %551
        %554 = vst.msk [vmem:[#allocation3 + $0x7] sm:$0x1] %vm339, %v552
        %s555 = sld [smem:[#allocation10 + $0x1]]
        %v556 = vstv %s555
        %s557 = sld [smem:[#allocation9 + $0x8]]
        %v558 = vld [vmem:[#allocation2 + $0x1] sm:$0x1]
        %v559 = vstv %s557
        %v560 = vmul.f32 %v558, %v559
        %v561 = vadd.f32 %v556, %v560
        %s562 = sld [smem:[#allocation9 + $0x9]]
        %v563 = vld [vmem:[#allocation2 + $0x2] sm:$0x1]
        %v564 = vstv %s562
        %v565 = vmul.f32 %v563, %v564
        %v566 = vadd.f32 %v561, %v565
        %s567 = sld [smem:[#allocation9 + $0xa]]
        %v568 = vld [vmem:[#allocation2 + $0x3] sm:$0x1]
        %v569 = vstv %s567
        %v570 = vmul.f32 %v568, %v569
        %v571 = vadd.f32 %v566, %v570
        %s572 = sld [smem:[#allocation9 + $0xc]]
        %v573 = vstv %s572
        %v574 = vmul.f32 %v558, %v573
        %576 = vrot.lane.b32.xlu0 %v574, 127
        %v577 = vpop.permute.xlu0 %576
        %v579 = vadd.f32 %v571, %v577
        %s580 = sld [smem:[#allocation9 + $0xd]]
        %v581 = vstv %s580
        %v582 = vmul.f32 %v563, %v581
        %584 = vrot.lane.b32.xlu0 %v582, 127
        %v585 = vpop.permute.xlu0 %584
        %v587 = vadd.f32 %v579, %v585
        %s588 = sld [smem:[#allocation9 + $0xe]]
        %v589 = vstv %s588
        %v590 = vmul.f32 %v568, %v589
        %592 = vrot.lane.b32.xlu0 %v590, 127
        %v593 = vpop.permute.xlu0 %592
        %v595 = vadd.f32 %v587, %v593
        %v596 = vmax.f32 %v595, 0.0
        %598 = vrot.lane.b32.xlu0 %v596, 1
        %v599 = vpop.permute.xlu0 %598
        %601 = vst.msk [vmem:[#allocation3 + $0x8] sm:$0x1] %vm339, %v599
        %s602 = sld [smem:[#allocation4]]
        %v603 = vstv %s602
        %s604 = sld [smem:[#allocation12]]
        %v605 = vld [vmem:[#allocation3] sm:$0x1]
        %v606 = vstv %s604
        %v607 = vmul.f32 %v605, %v606
        %v608 = vadd.f32 %v603, %v607
        %s609 = sld [smem:[#allocation12 + $0x1]]
        %v610 = vld [vmem:[#allocation3 + $0x1] sm:$0x1]
        %v611 = vstv %s609
        %v612 = vmul.f32 %v610, %v611
        %v613 = vadd.f32 %v608, %v612
        %s614 = sld [smem:[#allocation12 + $0x2]]
        %v615 = vld [vmem:[#allocation3 + $0x2] sm:$0x1]
        %v616 = vstv %s614
        %v617 = vmul.f32 %v615, %v616
        %v618 = vadd.f32 %v613, %v617
        %s619 = sld [smem:[#allocation12 + $0x3]]
        %v620 = vld [vmem:[#allocation3 + $0x3] sm:$0x1]
        %v621 = vstv %s619
        %v622 = vmul.f32 %v620, %v621
        %v623 = vadd.f32 %v618, %v622
        %s624 = sld [smem:[#allocation12 + $0x4]]
        %v625 = vstv %s624
        %v626 = vmul.f32 %v605, %v625
        %628 = vrot.lane.b32.xlu0 %v626, 127
        %v629 = vpop.permute.xlu0 %628
        %v631 = vadd.f32 %v623, %v629
        %s632 = sld [smem:[#allocation12 + $0x5]]
        %v633 = vstv %s632
        %v634 = vmul.f32 %v610, %v633
        %636 = vrot.lane.b32.xlu0 %v634, 127
        %v637 = vpop.permute.xlu0 %636
        %v639 = vadd.f32 %v631, %v637
        %s640 = sld [smem:[#allocation12 + $0x6]]
        %v641 = vstv %s640
        %v642 = vmul.f32 %v615, %v641
        %644 = vrot.lane.b32.xlu0 %v642, 127
        %v645 = vpop.permute.xlu0 %644
        %v647 = vadd.f32 %v639, %v645
        %s648 = sld [smem:[#allocation12 + $0x7]]
        %v649 = vstv %s648
        %v650 = vmul.f32 %v620, %v649
        %652 = vrot.lane.b32.xlu0 %v650, 127
        %v653 = vpop.permute.xlu0 %652
        %v655 = vadd.f32 %v647, %v653
        %s656 = sld [smem:[#allocation12 + $0x8]]
        %v657 = vstv %s656
        %v658 = vmul.f32 %v605, %v657
        %660 = vrot.lane.b32.xlu0 %v658, 126
        %v661 = vpop.permute.xlu0 %660
        %v663 = vadd.f32 %v655, %v661
        %s664 = sld [smem:[#allocation12 + $0x9]]
        %v665 = vstv %s664
        %v666 = vmul.f32 %v610, %v665
        %668 = vrot.lane.b32.xlu0 %v666, 126
        %v669 = vpop.permute.xlu0 %668
        %v671 = vadd.f32 %v663, %v669
        %s672 = sld [smem:[#allocation12 + $0xa]]
        %v673 = vstv %s672
        %v674 = vmul.f32 %v615, %v673
        %676 = vrot.lane.b32.xlu0 %v674, 126
        %v677 = vpop.permute.xlu0 %676
        %v679 = vadd.f32 %v671, %v677
        %s680 = sld [smem:[#allocation12 + $0xb]]
        %v681 = vstv %s680
        %v682 = vmul.f32 %v620, %v681
        %684 = vrot.lane.b32.xlu0 %v682, 126
        %v685 = vpop.permute.xlu0 %684
        %v687 = vadd.f32 %v679, %v685
        %s688 = sld [smem:[#allocation12 + $0xc]]
        %v689 = vld [vmem:[#allocation3 + $0x5] sm:$0x1]
        %v690 = vstv %s688
        %v691 = vmul.f32 %v689, %v690
        %v692 = vadd.f32 %v687, %v691
        %s693 = sld [smem:[#allocation12 + $0xd]]
        %v694 = vld [vmem:[#allocation3 + $0x6] sm:$0x1]
        %v695 = vstv %s693
        %v696 = vmul.f32 %v694, %v695
        %v697 = vadd.f32 %v692, %v696
        %s698 = sld [smem:[#allocation12 + $0xe]]
        %v699 = vld [vmem:[#allocation3 + $0x7] sm:$0x1]
        %v700 = vstv %s698
        %v701 = vmul.f32 %v699, %v700
        %v702 = vadd.f32 %v697, %v701
        %s703 = sld [smem:[#allocation12 + $0xf]]
        %v704 = vld [vmem:[#allocation3 + $0x8] sm:$0x1]
        %v705 = vstv %s703
        %v706 = vmul.f32 %v704, %v705
        %v707 = vadd.f32 %v702, %v706
        %s708 = sld [smem:[#allocation12 + $0x10]]
        %v709 = vstv %s708
        %v710 = vmul.f32 %v689, %v709
        %712 = vrot.lane.b32.xlu0 %v710, 127
        %v713 = vpop.permute.xlu0 %712
        %v715 = vadd.f32 %v707, %v713
        %s716 = sld [smem:[#allocation12 + $0x11]]
        %v717 = vstv %s716
        %v718 = vmul.f32 %v694, %v717
        %720 = vrot.lane.b32.xlu0 %v718, 127
        %v721 = vpop.permute.xlu0 %720
        %v723 = vadd.f32 %v715, %v721
        %s724 = sld [smem:[#allocation12 + $0x12]]
        %v725 = vstv %s724
        %v726 = vmul.f32 %v699, %v725
        %728 = vrot.lane.b32.xlu0 %v726, 127
        %v729 = vpop.permute.xlu0 %728
        %v731 = vadd.f32 %v723, %v729
        %s732 = sld [smem:[#allocation12 + $0x13]]
        %v733 = vstv %s732
        %v734 = vmul.f32 %v704, %v733
        %736 = vrot.lane.b32.xlu0 %v734, 127
        %v737 = vpop.permute.xlu0 %736
        %v739 = vadd.f32 %v731, %v737
        %s740 = sld [smem:[#allocation12 + $0x14]]
        %v741 = vstv %s740
        %v742 = vmul.f32 %v689, %v741
        %744 = vrot.lane.b32.xlu0 %v742, 126
        %v745 = vpop.permute.xlu0 %744
        %v747 = vadd.f32 %v739, %v745
        %s748 = sld [smem:[#allocation12 + $0x15]]
        %v749 = vstv %s748
        %v750 = vmul.f32 %v694, %v749
        %752 = vrot.lane.b32.xlu0 %v750, 126
        %v753 = vpop.permute.xlu0 %752
        %v755 = vadd.f32 %v747, %v753
        %s756 = sld [smem:[#allocation12 + $0x16]]
        %v757 = vstv %s756
        %v758 = vmul.f32 %v699, %v757
        %760 = vrot.lane.b32.xlu0 %v758, 126
        %v761 = vpop.permute.xlu0 %760
        %v763 = vadd.f32 %v755, %v761
        %s764 = sld [smem:[#allocation12 + $0x17]]
        %v765 = vstv %s764
        %v766 = vmul.f32 %v704, %v765
        %768 = vrot.lane.b32.xlu0 %v766, 126
        %v769 = vpop.permute.xlu0 %768
        %v771 = vadd.f32 %v763, %v769
        %v772 = vmax.f32 %v771, 0.0
        %vm773 = vcmask 65536
        %774 = vst.msk [vmem:[%s279] sm:$0x1] %vm773, %v772
        %s775 = sld [smem:[#allocation4]]
        %v776 = vstv %s775
        %s777 = sld [smem:[#allocation12]]
        %v778 = vld [vmem:[#allocation3 + $0x1] sm:$0x1]
        %v779 = vstv %s777
        %v780 = vmul.f32 %v778, %v779
        %v781 = vadd.f32 %v776, %v780
        %s782 = sld [smem:[#allocation12 + $0x1]]
        %v783 = vld [vmem:[#allocation3 + $0x2] sm:$0x1]
        %v784 = vstv %s782
        %v785 = vmul.f32 %v783, %v784
        %v786 = vadd.f32 %v781, %v785
        %s787 = sld [smem:[#allocation12 + $0x2]]
        %v788 = vld [vmem:[#allocation3 + $0x3] sm:$0x1]
        %v789 = vstv %s787
        %v790 = vmul.f32 %v788, %v789
        %v791 = vadd.f32 %v786, %v790
        %s792 = sld [smem:[#allocation12 + $0x3]]
        %v793 = vld [vmem:[#allocation3 + $0x4] sm:$0x1]
        %v794 = vstv %s792
        %v795 = vmul.f32 %v793, %v794
        %v796 = vadd.f32 %v791, %v795
        %s797 = sld [smem:[#allocation12 + $0x4]]
        %v798 = vstv %s797
        %v799 = vmul.f32 %v778, %v798
        %801 = vrot.lane.b32.xlu0 %v799, 127
        %v802 = vpop.permute.xlu0 %801
        %v804 = vadd.f32 %v796, %v802
        %s805 = sld [smem:[#allocation12 + $0x5]]
        %v806 = vstv %s805
        %v807 = vmul.f32 %v783, %v806
        %809 = vrot.lane.b32.xlu0 %v807, 127
        %v810 = vpop.permute.xlu0 %809
        %v812 = vadd.f32 %v804, %v810
        %s813 = sld [smem:[#allocation12 + $0x6]]
        %v814 = vstv %s813
        %v815 = vmul.f32 %v788, %v814
        %817 = vrot.lane.b32.xlu0 %v815, 127
        %v818 = vpop.permute.xlu0 %817
        %v820 = vadd.f32 %v812, %v818
        %s821 = sld [smem:[#allocation12 + $0x7]]
        %v822 = vstv %s821
        %v823 = vmul.f32 %v793, %v822
        %825 = vrot.lane.b32.xlu0 %v823, 127
        %v826 = vpop.permute.xlu0 %825
        %v828 = vadd.f32 %v820, %v826
        %s829 = sld [smem:[#allocation12 + $0x8]]
        %v830 = vstv %s829
        %v831 = vmul.f32 %v778, %v830
        %833 = vrot.lane.b32.xlu0 %v831, 126
        %v834 = vpop.permute.xlu0 %833
        %v836 = vadd.f32 %v828, %v834
        %s837 = sld [smem:[#allocation12 + $0x9]]
        %v838 = vstv %s837
        %v839 = vmul.f32 %v783, %v838
        %841 = vrot.lane.b32.xlu0 %v839, 126
        %v842 = vpop.permute.xlu0 %841
        %v844 = vadd.f32 %v836, %v842
        %s845 = sld [smem:[#allocation12 + $0xa]]
        %v846 = vstv %s845
        %v847 = vmul.f32 %v788, %v846
        %849 = vrot.lane.b32.xlu0 %v847, 126
        %v850 = vpop.permute.xlu0 %849
        %v852 = vadd.f32 %v844, %v850
        %s853 = sld [smem:[#allocation12 + $0xb]]
        %v854 = vstv %s853
        %v855 = vmul.f32 %v793, %v854
        %857 = vrot.lane.b32.xlu0 %v855, 126
        %v858 = vpop.permute.xlu0 %857
        %v860 = vadd.f32 %v852, %v858
        %s861 = sld [smem:[#allocation12 + $0xc]]
        %v862 = vld [vmem:[#allocation3 + $0x6] sm:$0x1]
        %v863 = vstv %s861
        %v864 = vmul.f32 %v862, %v863
        %v865 = vadd.f32 %v860, %v864
        %s866 = sld [smem:[#allocation12 + $0xd]]
        %v867 = vld [vmem:[#allocation3 + $0x7] sm:$0x1]
        %v868 = vstv %s866
        %v869 = vmul.f32 %v867, %v868
        %v870 = vadd.f32 %v865, %v869
        %s871 = sld [smem:[#allocation12 + $0xe]]
        %v872 = vld [vmem:[#allocation3 + $0x8] sm:$0x1]
        %v873 = vstv %s871
        %v874 = vmul.f32 %v872, %v873
        %v875 = vadd.f32 %v870, %v874
        %s876 = sld [smem:[#allocation12 + $0xf]]
        %v877 = vld [vmem:[#allocation3 + $0x9] sm:$0x1]
        %v878 = vstv %s876
        %v879 = vmul.f32 %v877, %v878
        %v880 = vadd.f32 %v875, %v879
        %s881 = sld [smem:[#allocation12 + $0x10]]
        %v882 = vstv %s881
        %v883 = vmul.f32 %v862, %v882
        %885 = vrot.lane.b32.xlu0 %v883, 127
        %v886 = vpop.permute.xlu0 %885
        %v888 = vadd.f32 %v880, %v886
        %s889 = sld [smem:[#allocation12 + $0x11]]
        %v890 = vstv %s889
        %v891 = vmul.f32 %v867, %v890
        %893 = vrot.lane.b32.xlu0 %v891, 127
        %v894 = vpop.permute.xlu0 %893
        %v896 = vadd.f32 %v888, %v894
        %s897 = sld [smem:[#allocation12 + $0x12]]
        %v898 = vstv %s897
        %v899 = vmul.f32 %v872, %v898
        %901 = vrot.lane.b32.xlu0 %v899, 127
        %v902 = vpop.permute.xlu0 %901
        %v904 = vadd.f32 %v896, %v902
        %s905 = sld [smem:[#allocation12 + $0x13]]
        %v906 = vstv %s905
        %v907 = vmul.f32 %v877, %v906
        %909 = vrot.lane.b32.xlu0 %v907, 127
        %v910 = vpop.permute.xlu0 %909
        %v912 = vadd.f32 %v904, %v910
        %s913 = sld [smem:[#allocation12 + $0x14]]
        %v914 = vstv %s913
        %v915 = vmul.f32 %v862, %v914
        %917 = vrot.lane.b32.xlu0 %v915, 126
        %v918 = vpop.permute.xlu0 %917
        %v920 = vadd.f32 %v912, %v918
        %s921 = sld [smem:[#allocation12 + $0x15]]
        %v922 = vstv %s921
        %v923 = vmul.f32 %v867, %v922
        %925 = vrot.lane.b32.xlu0 %v923, 126
        %v926 = vpop.permute.xlu0 %925
        %v928 = vadd.f32 %v920, %v926
        %s929 = sld [smem:[#allocation12 + $0x16]]
        %v930 = vstv %s929
        %v931 = vmul.f32 %v872, %v930
        %933 = vrot.lane.b32.xlu0 %v931, 126
        %v934 = vpop.permute.xlu0 %933
        %v936 = vadd.f32 %v928, %v934
        %s937 = sld [smem:[#allocation12 + $0x17]]
        %v938 = vstv %s937
        %v939 = vmul.f32 %v877, %v938
        %941 = vrot.lane.b32.xlu0 %v939, 126
        %v942 = vpop.permute.xlu0 %941
        %v944 = vadd.f32 %v936, %v942
        %v945 = vmax.f32 %v944, 0.0
        %946 = vst.msk [vmem:[%s279 + $0x1] sm:$0x1] %vm773, %v945
        %s947 = sand.u32 %s143, 1
        %s948 = scalar_lea.sflag [#allocation7], %s947
        %s949 = sand.u32 %s143, 1
        %s950 = smul.addr %s949, 2
        %s951 = scalar_lea.vmem [#allocation13], %s950
        // Predicated region
        $region57: #{tpu_custom_call.1} parent=39 // pred_check
          %p952 = pneg %p153
        $region58: #{tpu_custom_call.1} parent=39 // pred_check_branch
          %954 = sbr.rel (%p952) target = $region60
        $region59: #{tpu_custom_call.1} parent=39 // pred_region
          %s956 = ssub.s32 32, 32
          %957 = vsyncadd %s948, %s956
          %s958 = smul.addr %s25, 32
          %s959 = scalar_lea.hbm %s5, %s958
          %s961 = sshll.u32 %s951, 4
          %s962 = int_to_ptr.vmem [resolvable:$true] %s961
          %964 = dma.vmem_to_hbm [thread:$0]  %s962, 32, %s959, %s948
        $region60: #{tpu_custom_call.1} parent=39 // pred_fallthru
          _
      $region40: #{tpu_custom_call.1} parent=5 // pred_fallthru
        _
      %p965 = scmp.le.s32.totalorder 2, %s20
      // Predicated region
      $region61: #{tpu_custom_call.1} parent=5 // pred_check
        %p966 = pneg %p965
      $region62: #{tpu_custom_call.1} parent=5 // pred_check_branch
        %968 = sbr.rel (%p966) target = $region64
      $region63: #{tpu_custom_call.1} parent=5 // pred_region
        %s969 = ssub.s32 %s20, 2
        // Predicated region
        $region65: #{tpu_custom_call.1} parent=63 // pred_check
          %p970 = pneg %p159
        $region66: #{tpu_custom_call.1} parent=63 // pred_check_branch
          %972 = sbr.rel (%p970) target = $region68
        $region67: #{tpu_custom_call.1} parent=63 // pred_region
          %s973 = sand.u32 %s144, 1
          %s974 = scalar_lea.sflag [#allocation7], %s973
          %s975 = sand.u32 %s144, 1
          %s976 = smul.addr %s975, 2
          %s977 = scalar_lea.vmem [#allocation13], %s976
          %978 = dma.done %s974, 32
        $region68: #{tpu_custom_call.1} parent=63 // pred_fallthru
          _
      $region64: #{tpu_custom_call.1} parent=5 // pred_fallthru
        _
    $region6: #{tpu_custom_call.1} parent=1 // loop_footer
      %s24 = sadd.s32 1, %s20
    $region7: #{tpu_custom_call.1} parent=1 // loop_footer_branch
      %19 = sbr.rel target = $region3
    $region8: #{tpu_custom_call.1} parent=1 // loop_exit
      _
    %979 = vsyncpa [#allocation6], 1
    %s980 = scalar_lea.sflag [#allocation6], 1
    %981 = vsyncpa %s980, 1
    %982 = vsyncpa [#allocation7], 1
    %s983 = scalar_lea.sflag [#allocation7], 1
    %984 = vsyncpa %s983, 1
    %985 = vsyncpa [#allocation8], 1
    %s986 = scalar_lea.sflag [#allocation8], 1
    %987 = vsyncpa %s986, 1
    %988 = vsyncpa [#allocation11], 1

</llo_original>
